<compile_context>
chip_gen: v6e
topology: v6e:2x2x1
jax: 0.10.0
libtpu: 0.0.40
codegen_flags: <defaults>
</compile_context>

<pallas_src>
import jax
import jax.numpy as jnp
from jax.experimental import pallas as pl
from jax.experimental.pallas import tpu as pltpu


def even_downsample_kernel(p00_ref, p01_ref, p10_ref, p11_ref,
                           w1_ref, b1_ref, w2_ref, b2_ref, out_ref):
    """One grid step handles `bt` batch elements, channels-last (C on lanes).

    p??_ref : (bt, Ho+1, Wo+1, C) even/odd (row, col) phases of the
              reflect-padded image.
    w1_ref  : (4C, C)  fc1 weight, rows in (part, channel) order p*C + c
    b1_ref  : (1, C)
    w2_ref  : (C, 4C)  fc2 weight, cols in order p*C + c
    b2_ref  : (1, 4C)
    out_ref : (bt, Ho, Wo, C)
    """
    f32 = jnp.float32
    bt, hp, wp, C = p00_ref.shape
    Ho, Wo = hp - 1, wp - 1

    p00, p01, p10, p11 = p00_ref[...], p01_ref[...], p10_ref[...], p11_ref[...]

    def c32(v):                      # lazy f32 promotion (no-op for f32 I/O)
        return v.astype(f32)

    # Vertical [1,2,1] blurs along H (axis 1 -- not a tiled dim, cheap slices);
    # exactly one evaluation per (row-phase, col-phase) pair, no 1/16 scaling.
    ve_t = c32(p00[:, :Ho]) + 2.0 * c32(p10[:, :Ho]) + c32(p00[:, 1:])  # col-even, top pad
    vo_t = c32(p01[:, :Ho]) + 2.0 * c32(p11[:, :Ho]) + c32(p01[:, 1:])  # col-odd , top pad
    ve_b = c32(p10[:, :Ho]) + 2.0 * c32(p00[:, 1:]) + c32(p10[:, 1:])   # col-even, bottom pad
    vo_b = c32(p11[:, :Ho]) + 2.0 * c32(p01[:, 1:]) + c32(p11[:, 1:])   # col-odd , bottom pad

    # ---- Pass 1: pooled sums per (part, channel) straight from v-blur
    # reductions + O(Ho)-sized edge-column corrections.  For the horizontal
    # [1,2,1] blur over columns 0..Wo:
    #   sum_w(left-pad  part) = 2*Σve + 2*Σvo - ve[.,0] - ve[.,Wo] - 2*vo[.,Wo]
    #   sum_w(right-pad part) = 2*Σve + 2*Σvo - 2*ve[.,0] - vo[.,0] - vo[.,Wo]
    def reduce_parts(v):
        s = jnp.sum(v, axis=(1, 2))                 # (bt, C) full sum
        e0 = jnp.sum(v[:, :, :1, :], axis=(1, 2))   # (bt, C) first column
        eW = jnp.sum(v[:, :, Wo:, :], axis=(1, 2))  # (bt, C) last column
        return s, e0, eW

    se_t, e0_t, eW_t = reduce_parts(ve_t)
    so_t, o0_t, oW_t = reduce_parts(vo_t)
    se_b, e0_b, eW_b = reduce_parts(ve_b)
    so_b, o0_b, oW_b = reduce_parts(vo_b)

    st2 = 2.0 * (se_t + so_t)
    sb2 = 2.0 * (se_b + so_b)
    # PyTorch part order: 1=(top,left) 2=(bottom,left) 3=(top,right) 4=(bottom,right)
    s1 = st2 - e0_t - eW_t - 2.0 * oW_t
    s2 = sb2 - e0_b - eW_b - 2.0 * oW_b
    s3 = st2 - 2.0 * e0_t - o0_t - oW_t
    s4 = sb2 - 2.0 * e0_b - o0_b - oW_b
    inv_scale = 1.0 / (16.0 * Ho * Wo)              # filter's 1/16 folded into the mean
    pool = jnp.concatenate([s1, s2, s3, s4], axis=-1) * inv_scale    # (bt, 4C) p*C+c

    # fc1 (1x1 conv 4C->C) + ReLU, fc2 (1x1 conv C->4C) + Sigmoid.
    h1 = jnp.dot(pool, w1_ref[...], preferred_element_type=f32) + b1_ref[...]
    h1 = jnp.maximum(h1, 0.0)                                        # (bt, C)
    gate = jax.nn.sigmoid(
        jnp.dot(h1, w2_ref[...], preferred_element_type=f32) + b2_ref[...])  # (bt, 4C)

    # ---- Pass 2: gates (and 1/16) factored into 8 per-channel coefficients of
    # the shifted v-blur slices; one weighted sum, one offset-1 sublane slice.
    def g(p):                                        # (bt, 1, 1, C), includes 1/16
        return (gate[:, p * C:(p + 1) * C] * (1.0 / 16.0))[:, None, None, :]

    g1, g2, g3, g4 = g(0), g(1), g(2), g(3)

    # A multiplies column j of the v-blurs, Bv multiplies column j+1.
    A = g1 * ve_t + (2.0 * g1 + g3) * vo_t + g2 * ve_b + (2.0 * g2 + g4) * vo_b
    Bv = (g1 + 2.0 * g3) * ve_t + g3 * vo_t + (g2 + 2.0 * g4) * ve_b + g4 * vo_b
    out = A[:, :, :Wo, :] + Bv[:, :, 1:, :]
    out_ref[...] = out.astype(out_ref.dtype)


def _tpu_info():
    """Return (vmem_capacity_bytes, tensorcores_per_chip) with safe fallbacks."""
    vmem = None
    try:
        vmem = int(pltpu.get_tpu_info().vmem_capacity_bytes)
    except Exception:
        vmem = None
    kind = ""
    try:
        kind = str(getattr(jax.devices()[0], "device_kind", "") or "").lower()
    except Exception:
        kind = ""
    is_v7 = "v7" in kind
    if vmem is None:
        # Unknown: be v7x-conservative (64 MiB / TensorCore); v5e/v6e have 128 MiB.
        vmem = 64 * 1024 * 1024 if (is_v7 or not kind) else 128 * 1024 * 1024
    n_cores = 2 if (is_v7 or vmem <= 96 * 1024 * 1024) else 1
    return vmem, n_cores


def _pick_batch_tile(B, per_image_bytes, budget_bytes, min_steps):
    """Largest divisor of B fitting the budget; only on multi-TensorCore chips
    (v7x) keep at least `min_steps` grid steps so both cores get parallel work."""
    cap = max(1, budget_bytes // max(per_image_bytes, 1))
    if min_steps > 1 and B >= min_steps:
        cap = min(cap, B // min_steps)
    bt = int(max(1, min(B, cap)))
    while B % bt:
        bt -= 1
    return bt


def even_downsample(x, w1, b1, w2, b2, *, io_dtype=None):
    """x: (B, C, H, W); w1: (C, 4C); b1: (C,); w2: (4C, C); b2: (4C,).

    fc1 = Conv2d(4C->C, 1x1), fc2 = Conv2d(C->4C, 1x1) weights squeezed to 2-D.
    Returns (B, C, H//2, W//2) in x.dtype.  io_dtype=jnp.bfloat16 halves the
    phase-input HBM traffic (recommended on bandwidth-bound v5e); in-kernel
    math stays f32.
    """
    B, C, H, W = x.shape
    assert H % 2 == 0 and W % 2 == 0, "even_Downsample expects even H, W"
    Ho, Wo = H // 2, W // 2

    # NCHW -> NHWC, reflect pad 1 on every side, even/odd (row, col) phase
    # deinterleave in one chain so XLA folds the layout work into the
    # phase-producing copies.  All four PyTorch "parts" are phase-shifted
    # windows of this single padded image.
    xl = jnp.transpose(x, (0, 2, 3, 1))                                # (B,H,W,C)
    P = jnp.pad(xl, ((0, 0), (1, 1), (1, 1), (0, 0)), mode="reflect")  # (B,H+2,W+2,C)
    if io_dtype is not None:
        P = P.astype(io_dtype)
    p00 = P[:, 0::2, 0::2, :]   # (B, Ho+1, Wo+1, C) even rows, even cols
    p01 = P[:, 0::2, 1::2, :]
    p10 = P[:, 1::2, 0::2, :]
    p11 = P[:, 1::2, 1::2, :]

    # fc weights/biases re-ordered once to the kernel's (part, channel) order
    # p*C + c (original interleaved channel index is k = c*4 + p).
    f32 = jnp.float32
    w1_k = w1.astype(f32).reshape(C, C, 4).transpose(0, 2, 1).reshape(C, 4 * C).T  # (4C, C)
    b1_k = b1.astype(f32).reshape(1, C)
    w2_k = w2.astype(f32).reshape(C, 4, C).transpose(1, 0, 2).reshape(4 * C, C).T  # (C, 4C)
    b2_k = b2.astype(f32).reshape(C, 4).T.reshape(1, 4 * C)

    # --- VMEM plan (honest accounting):
    #   * double-buffered I/O blocks (4 phases + output),
    #   * double-buffered fc parameter blocks,
    #   * ~10 image-equivalents of f32 intermediates (4 v-blurs live across the
    #     fc matmuls, A/Bv weighted sums, output, slice/cast temporaries).
    vmem_cap, n_cores = _tpu_info()
    io_item = p00.dtype.itemsize
    phase_bytes = (Ho + 1) * (Wo + 1) * C * io_item
    out_bytes = Ho * Wo * C * x.dtype.itemsize
    img_f32 = Ho * Wo * C * 4
    per_image = 2 * (4 * phase_bytes + out_bytes) + 10 * img_f32
    weight_bytes = 2 * (4 * C * C + C + C * 4 * C + 4 * C) * 4     # double-buffered
    budget = int(0.55 * vmem_cap) - weight_bytes
    bt = _pick_batch_tile(B, per_image, max(budget, per_image), min_steps=n_cores)

    need = bt * per_image + weight_bytes + (8 << 20)               # + slack
    vmem_limit = int(min(max(32 << 20, need), vmem_cap - (4 << 20)))

    phase_spec = pl.BlockSpec((bt, Ho + 1, Wo + 1, C), lambda b: (b, 0, 0, 0))

    def full_spec(shape):
        return pl.BlockSpec(shape, lambda b, n=len(shape): (0,) * n)

    out_nhwc = pl.pallas_call(
        even_downsample_kernel,
        out_shape=jax.ShapeDtypeStruct((B, Ho, Wo, C), x.dtype),
        grid=(B // bt,),
        in_specs=[
            phase_spec, phase_spec, phase_spec, phase_spec,
            full_spec((4 * C, C)), full_spec((1, C)),
            full_spec((C, 4 * C)), full_spec((1, 4 * C)),
        ],
        out_specs=pl.BlockSpec((bt, Ho, Wo, C), lambda b: (b, 0, 0, 0)),
        compiler_params=pltpu.CompilerParams(
            dimension_semantics=("parallel",),
            vmem_limit_bytes=vmem_limit),
    )(p00, p01, p10, p11, w1_k, b1_k, w2_k, b2_k)

    # Back to the module's NCHW contract (layout plumbing only).
    return jnp.transpose(out_nhwc, (0, 3, 1, 2))


def reference_forward(x, w1, b1, w2, b2):
    """Pure-JAX mirror of the PyTorch forward (for validation)."""
    B, C, H, W = x.shape
    Ho, Wo = H // 2, W // 2
    part1 = jnp.pad(x, ((0, 0), (0, 0), (1, 0), (1, 0)), mode='reflect')
    part2 = jnp.pad(x, ((0, 0), (0, 0), (0, 1), (1, 0)), mode='reflect')
    part3 = jnp.pad(x, ((0, 0), (0, 0), (1, 0), (0, 1)), mode='reflect')
    part4 = jnp.pad(x, ((0, 0), (0, 0), (0, 1), (0, 1)), mode='reflect')
    xc = jnp.concatenate([part1, part2, part3, part4], axis=1)   # (B, 4C, H+1, W+1)

    a = jnp.array([1.0, 2.0, 1.0], jnp.float32)
    f = jnp.outer(a, a)
    f = f / jnp.sum(f)
    conv = jnp.zeros((B, 4 * C, Ho, Wo), jnp.float32)
    for di in range(3):
        for dj in range(3):
            conv = conv + f[di, dj] * xc[:, :, di:di + 2 * Ho:2, dj:dj + 2 * Wo:2]

    y = conv.reshape(B, 4, C, Ho, Wo).transpose(0, 2, 1, 3, 4).reshape(B, 4 * C, Ho, Wo)
    pool = y.mean(axis=(2, 3), keepdims=True)                    # (B, 4C, 1, 1)
    o1 = jax.nn.relu(jnp.einsum('bkhw,jk->bjhw', pool, w1) + b1[None, :, None, None])
    o2 = jax.nn.sigmoid(jnp.einsum('bjhw,kj->bkhw', o1, w2) + b2[None, :, None, None])
    y = y * o2
    return y.reshape(B, C, 4, Ho, Wo).sum(axis=2)


if __name__ == "__main__":
    B, C, H, W = 2, 4, 16, 16
    key = jax.random.PRNGKey(0)
    kx, k1, k2, k3, k4 = jax.random.split(key, 5)

    x = jax.random.normal(kx, (B, C, H, W), jnp.float32)
    # Synthetic parameters (shapes from the module __init__):
    #   fc1: Conv2d(4C -> C, 1x1)  -> weight (C, 4C), bias (C,)
    #   fc2: Conv2d(C -> 4C, 1x1)  -> weight (4C, C), bias (4C,)
    w1 = 0.1 * jax.random.normal(k1, (C, 4 * C), jnp.float32)
    b1 = 0.1 * jax.random.normal(k2, (C,), jnp.float32)
    w2 = 0.1 * jax.random.normal(k3, (4 * C, C), jnp.float32)
    b2 = 0.1 * jax.random.normal(k4, (4 * C,), jnp.float32)

    out = even_downsample(x, w1, b1, w2, b2)
    out = jax.block_until_ready(out)

    ref = reference_forward(x, w1, b1, w2, b2)
    assert out.shape == (B, C, H // 2, W // 2)
    assert jnp.allclose(out, ref, rtol=1e-4, atol=1e-4), (
        float(jnp.max(jnp.abs(out - ref))))

    print("KERNEL_OK")
</pallas_src>

<mosaic_0001>
module attributes {stable_mosaic.version = 11 : i64} {
  func.func @even_downsample_kernel(%arg0: i32, %arg1: memref<2x9x9x4xf32, #tpu.memory_space<vmem>>, %arg2: memref<2x9x9x4xf32, #tpu.memory_space<vmem>>, %arg3: memref<2x9x9x4xf32, #tpu.memory_space<vmem>>, %arg4: memref<2x9x9x4xf32, #tpu.memory_space<vmem>>, %arg5: memref<16x4xf32, #tpu.memory_space<vmem>>, %arg6: memref<1x4xf32, #tpu.memory_space<vmem>>, %arg7: memref<4x16xf32, #tpu.memory_space<vmem>>, %arg8: memref<1x16xf32, #tpu.memory_space<vmem>>, %arg9: memref<2x8x8x4xf32, #tpu.memory_space<vmem>>) attributes {dimension_semantics = [#tpu.dimension_semantics<parallel>], iteration_bounds = array<i64: 1>, scalar_prefetch = 0 : i64, scratch_operands = 0 : i64, tpu.core_type = #tpu.core_type<tc>, window_params = [{transform_indices = @transform_0, window_bounds = array<i64: 2, 9, 9, 4>}, {transform_indices = @transform_1, window_bounds = array<i64: 2, 9, 9, 4>}, {transform_indices = @transform_2, window_bounds = array<i64: 2, 9, 9, 4>}, {transform_indices = @transform_3, window_bounds = array<i64: 2, 9, 9, 4>}, {pipeline_mode = #tpu.pipeline_mode<synchronous>, transform_indices = @transform_4, window_bounds = array<i64: 16, 4>}, {pipeline_mode = #tpu.pipeline_mode<synchronous>, transform_indices = @transform_5, window_bounds = array<i64: 1, 4>}, {pipeline_mode = #tpu.pipeline_mode<synchronous>, transform_indices = @transform_6, window_bounds = array<i64: 4, 16>}, {pipeline_mode = #tpu.pipeline_mode<synchronous>, transform_indices = @transform_7, window_bounds = array<i64: 1, 16>}, {transform_indices = @transform_8, window_bounds = array<i64: 2, 8, 8, 4>}]} {
    %c0 = arith.constant 0 : index
    %c0_0 = arith.constant 0 : index
    %c0_1 = arith.constant 0 : index
    %c0_2 = arith.constant 0 : index
    %0 = vector.load %arg1[%c0, %c0_0, %c0_1, %c0_2] : memref<2x9x9x4xf32, #tpu.memory_space<vmem>>, vector<2x9x9x4xf32>
    %c0_3 = arith.constant 0 : index
    %c0_4 = arith.constant 0 : index
    %c0_5 = arith.constant 0 : index
    %c0_6 = arith.constant 0 : index
    %1 = vector.load %arg2[%c0_3, %c0_4, %c0_5, %c0_6] : memref<2x9x9x4xf32, #tpu.memory_space<vmem>>, vector<2x9x9x4xf32>
    %c0_7 = arith.constant 0 : index
    %c0_8 = arith.constant 0 : index
    %c0_9 = arith.constant 0 : index
    %c0_10 = arith.constant 0 : index
    %2 = vector.load %arg3[%c0_7, %c0_8, %c0_9, %c0_10] : memref<2x9x9x4xf32, #tpu.memory_space<vmem>>, vector<2x9x9x4xf32>
    %c0_11 = arith.constant 0 : index
    %c0_12 = arith.constant 0 : index
    %c0_13 = arith.constant 0 : index
    %c0_14 = arith.constant 0 : index
    %3 = vector.load %arg4[%c0_11, %c0_12, %c0_13, %c0_14] : memref<2x9x9x4xf32, #tpu.memory_space<vmem>>, vector<2x9x9x4xf32>
    %4 = vector.extract_strided_slice %0 {offsets = [0, 0, 0, 0], sizes = [2, 8, 9, 4], strides = [1, 1, 1, 1]} : vector<2x9x9x4xf32> to vector<2x8x9x4xf32>
    %5 = vector.extract_strided_slice %2 {offsets = [0, 0, 0, 0], sizes = [2, 8, 9, 4], strides = [1, 1, 1, 1]} : vector<2x9x9x4xf32> to vector<2x8x9x4xf32>
    %cst = arith.constant 2.000000e+00 : f32
    %6 = vector.broadcast %cst : f32 to vector<2x8x9x4xf32>
    %7 = arith.mulf %6, %5 : vector<2x8x9x4xf32>
    %8 = arith.addf %4, %7 : vector<2x8x9x4xf32>
    %9 = vector.extract_strided_slice %0 {offsets = [0, 1, 0, 0], sizes = [2, 8, 9, 4], strides = [1, 1, 1, 1]} : vector<2x9x9x4xf32> to vector<2x8x9x4xf32>
    %10 = arith.addf %8, %9 : vector<2x8x9x4xf32>
    %11 = vector.extract_strided_slice %1 {offsets = [0, 0, 0, 0], sizes = [2, 8, 9, 4], strides = [1, 1, 1, 1]} : vector<2x9x9x4xf32> to vector<2x8x9x4xf32>
    %12 = vector.extract_strided_slice %3 {offsets = [0, 0, 0, 0], sizes = [2, 8, 9, 4], strides = [1, 1, 1, 1]} : vector<2x9x9x4xf32> to vector<2x8x9x4xf32>
    %cst_15 = arith.constant 2.000000e+00 : f32
    %13 = vector.broadcast %cst_15 : f32 to vector<2x8x9x4xf32>
    %14 = arith.mulf %13, %12 : vector<2x8x9x4xf32>
    %15 = arith.addf %11, %14 : vector<2x8x9x4xf32>
    %16 = vector.extract_strided_slice %1 {offsets = [0, 1, 0, 0], sizes = [2, 8, 9, 4], strides = [1, 1, 1, 1]} : vector<2x9x9x4xf32> to vector<2x8x9x4xf32>
    %17 = arith.addf %15, %16 : vector<2x8x9x4xf32>
    %18 = vector.extract_strided_slice %2 {offsets = [0, 0, 0, 0], sizes = [2, 8, 9, 4], strides = [1, 1, 1, 1]} : vector<2x9x9x4xf32> to vector<2x8x9x4xf32>
    %19 = vector.extract_strided_slice %0 {offsets = [0, 1, 0, 0], sizes = [2, 8, 9, 4], strides = [1, 1, 1, 1]} : vector<2x9x9x4xf32> to vector<2x8x9x4xf32>
    %cst_16 = arith.constant 2.000000e+00 : f32
    %20 = vector.broadcast %cst_16 : f32 to vector<2x8x9x4xf32>
    %21 = arith.mulf %20, %19 : vector<2x8x9x4xf32>
    %22 = arith.addf %18, %21 : vector<2x8x9x4xf32>
    %23 = vector.extract_strided_slice %2 {offsets = [0, 1, 0, 0], sizes = [2, 8, 9, 4], strides = [1, 1, 1, 1]} : vector<2x9x9x4xf32> to vector<2x8x9x4xf32>
    %24 = arith.addf %22, %23 : vector<2x8x9x4xf32>
    %25 = vector.extract_strided_slice %3 {offsets = [0, 0, 0, 0], sizes = [2, 8, 9, 4], strides = [1, 1, 1, 1]} : vector<2x9x9x4xf32> to vector<2x8x9x4xf32>
    %26 = vector.extract_strided_slice %1 {offsets = [0, 1, 0, 0], sizes = [2, 8, 9, 4], strides = [1, 1, 1, 1]} : vector<2x9x9x4xf32> to vector<2x8x9x4xf32>
    %cst_17 = arith.constant 2.000000e+00 : f32
    %27 = vector.broadcast %cst_17 : f32 to vector<2x8x9x4xf32>
    %28 = arith.mulf %27, %26 : vector<2x8x9x4xf32>
    %29 = arith.addf %25, %28 : vector<2x8x9x4xf32>
    %30 = vector.extract_strided_slice %3 {offsets = [0, 1, 0, 0], sizes = [2, 8, 9, 4], strides = [1, 1, 1, 1]} : vector<2x9x9x4xf32> to vector<2x8x9x4xf32>
    %31 = arith.addf %29, %30 : vector<2x8x9x4xf32>
    %cst_18 = arith.constant dense<0.000000e+00> : vector<2x4xf32>
    %32 = vector.multi_reduction <add>, %10, %cst_18 [1, 2] : vector<2x8x9x4xf32> to vector<2x4xf32>
    %33 = vector.extract_strided_slice %10 {offsets = [0, 0, 0, 0], sizes = [2, 8, 1, 4], strides = [1, 1, 1, 1]} : vector<2x8x9x4xf32> to vector<2x8x1x4xf32>
    %cst_19 = arith.constant dense<0.000000e+00> : vector<2x4xf32>
    %34 = vector.multi_reduction <add>, %33, %cst_19 [1, 2] : vector<2x8x1x4xf32> to vector<2x4xf32>
    %35 = vector.extract_strided_slice %10 {offsets = [0, 0, 8, 0], sizes = [2, 8, 1, 4], strides = [1, 1, 1, 1]} : vector<2x8x9x4xf32> to vector<2x8x1x4xf32>
    %cst_20 = arith.constant dense<0.000000e+00> : vector<2x4xf32>
    %36 = vector.multi_reduction <add>, %35, %cst_20 [1, 2] : vector<2x8x1x4xf32> to vector<2x4xf32>
    %cst_21 = arith.constant dense<0.000000e+00> : vector<2x4xf32>
    %37 = vector.multi_reduction <add>, %17, %cst_21 [1, 2] : vector<2x8x9x4xf32> to vector<2x4xf32>
    %38 = vector.extract_strided_slice %17 {offsets = [0, 0, 0, 0], sizes = [2, 8, 1, 4], strides = [1, 1, 1, 1]} : vector<2x8x9x4xf32> to vector<2x8x1x4xf32>
    %cst_22 = arith.constant dense<0.000000e+00> : vector<2x4xf32>
    %39 = vector.multi_reduction <add>, %38, %cst_22 [1, 2] : vector<2x8x1x4xf32> to vector<2x4xf32>
    %40 = vector.extract_strided_slice %17 {offsets = [0, 0, 8, 0], sizes = [2, 8, 1, 4], strides = [1, 1, 1, 1]} : vector<2x8x9x4xf32> to vector<2x8x1x4xf32>
    %cst_23 = arith.constant dense<0.000000e+00> : vector<2x4xf32>
    %41 = vector.multi_reduction <add>, %40, %cst_23 [1, 2] : vector<2x8x1x4xf32> to vector<2x4xf32>
    %cst_24 = arith.constant dense<0.000000e+00> : vector<2x4xf32>
    %42 = vector.multi_reduction <add>, %24, %cst_24 [1, 2] : vector<2x8x9x4xf32> to vector<2x4xf32>
    %43 = vector.extract_strided_slice %24 {offsets = [0, 0, 0, 0], sizes = [2, 8, 1, 4], strides = [1, 1, 1, 1]} : vector<2x8x9x4xf32> to vector<2x8x1x4xf32>
    %cst_25 = arith.constant dense<0.000000e+00> : vector<2x4xf32>
    %44 = vector.multi_reduction <add>, %43, %cst_25 [1, 2] : vector<2x8x1x4xf32> to vector<2x4xf32>
    %45 = vector.extract_strided_slice %24 {offsets = [0, 0, 8, 0], sizes = [2, 8, 1, 4], strides = [1, 1, 1, 1]} : vector<2x8x9x4xf32> to vector<2x8x1x4xf32>
    %cst_26 = arith.constant dense<0.000000e+00> : vector<2x4xf32>
    %46 = vector.multi_reduction <add>, %45, %cst_26 [1, 2] : vector<2x8x1x4xf32> to vector<2x4xf32>
    %cst_27 = arith.constant dense<0.000000e+00> : vector<2x4xf32>
    %47 = vector.multi_reduction <add>, %31, %cst_27 [1, 2] : vector<2x8x9x4xf32> to vector<2x4xf32>
    %48 = vector.extract_strided_slice %31 {offsets = [0, 0, 0, 0], sizes = [2, 8, 1, 4], strides = [1, 1, 1, 1]} : vector<2x8x9x4xf32> to vector<2x8x1x4xf32>
    %cst_28 = arith.constant dense<0.000000e+00> : vector<2x4xf32>
    %49 = vector.multi_reduction <add>, %48, %cst_28 [1, 2] : vector<2x8x1x4xf32> to vector<2x4xf32>
    %50 = vector.extract_strided_slice %31 {offsets = [0, 0, 8, 0], sizes = [2, 8, 1, 4], strides = [1, 1, 1, 1]} : vector<2x8x9x4xf32> to vector<2x8x1x4xf32>
    %cst_29 = arith.constant dense<0.000000e+00> : vector<2x4xf32>
    %51 = vector.multi_reduction <add>, %50, %cst_29 [1, 2] : vector<2x8x1x4xf32> to vector<2x4xf32>
    %52 = arith.addf %32, %37 : vector<2x4xf32>
    %cst_30 = arith.constant 2.000000e+00 : f32
    %53 = vector.broadcast %cst_30 : f32 to vector<2x4xf32>
    %54 = arith.mulf %53, %52 : vector<2x4xf32>
    %55 = arith.addf %42, %47 : vector<2x4xf32>
    %cst_31 = arith.constant 2.000000e+00 : f32
    %56 = vector.broadcast %cst_31 : f32 to vector<2x4xf32>
    %57 = arith.mulf %56, %55 : vector<2x4xf32>
    %58 = arith.subf %54, %34 : vector<2x4xf32>
    %59 = arith.subf %58, %36 : vector<2x4xf32>
    %cst_32 = arith.constant 2.000000e+00 : f32
    %60 = vector.broadcast %cst_32 : f32 to vector<2x4xf32>
    %61 = arith.mulf %60, %41 : vector<2x4xf32>
    %62 = arith.subf %59, %61 : vector<2x4xf32>
    %63 = arith.subf %57, %44 : vector<2x4xf32>
    %64 = arith.subf %63, %46 : vector<2x4xf32>
    %cst_33 = arith.constant 2.000000e+00 : f32
    %65 = vector.broadcast %cst_33 : f32 to vector<2x4xf32>
    %66 = arith.mulf %65, %51 : vector<2x4xf32>
    %67 = arith.subf %64, %66 : vector<2x4xf32>
    %cst_34 = arith.constant 2.000000e+00 : f32
    %68 = vector.broadcast %cst_34 : f32 to vector<2x4xf32>
    %69 = arith.mulf %68, %34 : vector<2x4xf32>
    %70 = arith.subf %54, %69 : vector<2x4xf32>
    %71 = arith.subf %70, %39 : vector<2x4xf32>
    %72 = arith.subf %71, %41 : vector<2x4xf32>
    %cst_35 = arith.constant 2.000000e+00 : f32
    %73 = vector.broadcast %cst_35 : f32 to vector<2x4xf32>
    %74 = arith.mulf %73, %44 : vector<2x4xf32>
    %75 = arith.subf %57, %74 : vector<2x4xf32>
    %76 = arith.subf %75, %49 : vector<2x4xf32>
    %77 = arith.subf %76, %51 : vector<2x4xf32>
    %78 = tpu.concatenate %62, %67, %72, %77 in 1 : vector<2x4xf32>, vector<2x4xf32>, vector<2x4xf32>, vector<2x4xf32> -> vector<2x16xf32>
    %cst_36 = arith.constant 9.765625E-4 : f32
    %79 = vector.broadcast %cst_36 : f32 to vector<2x16xf32>
    %80 = arith.mulf %78, %79 : vector<2x16xf32>
    %c0_37 = arith.constant 0 : index
    %c0_38 = arith.constant 0 : index
    %81 = vector.load %arg5[%c0_37, %c0_38] : memref<16x4xf32, #tpu.memory_space<vmem>>, vector<16x4xf32>
    %cst_39 = arith.constant dense<0.000000e+00> : vector<2x4xf32>
    %82 = tpu.matmul %80, %81, %cst_39 {dimension_numbers = #tpu.dot_dimension_numbers<[1], [0], [0], [1], [0, 0, 1, 1], [], []>} : vector<2x16xf32>, vector<16x4xf32>, vector<2x4xf32> -> vector<2x4xf32>
    %c0_40 = arith.constant 0 : index
    %c0_41 = arith.constant 0 : index
    %83 = vector.load %arg6[%c0_40, %c0_41] : memref<1x4xf32, #tpu.memory_space<vmem>>, vector<1x4xf32>
    %84 = vector.broadcast %83 : vector<1x4xf32> to vector<2x4xf32>
    %85 = arith.addf %82, %84 : vector<2x4xf32>
    %cst_42 = arith.constant 0.000000e+00 : f32
    %86 = vector.broadcast %cst_42 : f32 to vector<2x4xf32>
    %87 = arith.maximumf %85, %86 : vector<2x4xf32>
    %c0_43 = arith.constant 0 : index
    %c0_44 = arith.constant 0 : index
    %88 = vector.load %arg7[%c0_43, %c0_44] : memref<4x16xf32, #tpu.memory_space<vmem>>, vector<4x16xf32>
    %cst_45 = arith.constant dense<0.000000e+00> : vector<2x16xf32>
    %89 = tpu.matmul %87, %88, %cst_45 {dimension_numbers = #tpu.dot_dimension_numbers<[1], [0], [0], [1], [0, 0, 1, 1], [], []>} : vector<2x4xf32>, vector<4x16xf32>, vector<2x16xf32> -> vector<2x16xf32>
    %c0_46 = arith.constant 0 : index
    %c0_47 = arith.constant 0 : index
    %90 = vector.load %arg8[%c0_46, %c0_47] : memref<1x16xf32, #tpu.memory_space<vmem>>, vector<1x16xf32>
    %91 = vector.broadcast %90 : vector<1x16xf32> to vector<2x16xf32>
    %92 = arith.addf %89, %91 : vector<2x16xf32>
    %93 = arith.negf %92 : vector<2x16xf32>
    %94 = math.exp %93 : vector<2x16xf32>
    %cst_48 = arith.constant 1.000000e+00 : f32
    %95 = vector.broadcast %cst_48 : f32 to vector<2x16xf32>
    %96 = arith.addf %95, %94 : vector<2x16xf32>
    %97 = arith.divf %95, %96 : vector<2x16xf32>
    %98 = vector.extract_strided_slice %97 {offsets = [0, 0], sizes = [2, 4], strides = [1, 1]} : vector<2x16xf32> to vector<2x4xf32>
    %cst_49 = arith.constant 6.250000e-02 : f32
    %99 = vector.broadcast %cst_49 : f32 to vector<2x4xf32>
    %100 = arith.mulf %98, %99 : vector<2x4xf32>
    %101 = vector.shape_cast %100 : vector<2x4xf32> to vector<2x1x1x4xf32>
    %102 = vector.extract_strided_slice %97 {offsets = [0, 4], sizes = [2, 4], strides = [1, 1]} : vector<2x16xf32> to vector<2x4xf32>
    %cst_50 = arith.constant 6.250000e-02 : f32
    %103 = vector.broadcast %cst_50 : f32 to vector<2x4xf32>
    %104 = arith.mulf %102, %103 : vector<2x4xf32>
    %105 = vector.shape_cast %104 : vector<2x4xf32> to vector<2x1x1x4xf32>
    %106 = vector.extract_strided_slice %97 {offsets = [0, 8], sizes = [2, 4], strides = [1, 1]} : vector<2x16xf32> to vector<2x4xf32>
    %cst_51 = arith.constant 6.250000e-02 : f32
    %107 = vector.broadcast %cst_51 : f32 to vector<2x4xf32>
    %108 = arith.mulf %106, %107 : vector<2x4xf32>
    %109 = vector.shape_cast %108 : vector<2x4xf32> to vector<2x1x1x4xf32>
    %110 = vector.extract_strided_slice %97 {offsets = [0, 12], sizes = [2, 4], strides = [1, 1]} : vector<2x16xf32> to vector<2x4xf32>
    %cst_52 = arith.constant 6.250000e-02 : f32
    %111 = vector.broadcast %cst_52 : f32 to vector<2x4xf32>
    %112 = arith.mulf %110, %111 : vector<2x4xf32>
    %113 = vector.shape_cast %112 : vector<2x4xf32> to vector<2x1x1x4xf32>
    %114 = vector.broadcast %101 : vector<2x1x1x4xf32> to vector<2x8x9x4xf32>
    %115 = arith.mulf %114, %10 : vector<2x8x9x4xf32>
    %cst_53 = arith.constant 2.000000e+00 : f32
    %116 = vector.broadcast %cst_53 : f32 to vector<2x1x1x4xf32>
    %117 = arith.mulf %116, %101 : vector<2x1x1x4xf32>
    %118 = arith.addf %117, %109 : vector<2x1x1x4xf32>
    %119 = vector.broadcast %118 : vector<2x1x1x4xf32> to vector<2x8x9x4xf32>
    %120 = arith.mulf %119, %17 : vector<2x8x9x4xf32>
    %121 = arith.addf %115, %120 : vector<2x8x9x4xf32>
    %122 = vector.broadcast %105 : vector<2x1x1x4xf32> to vector<2x8x9x4xf32>
    %123 = arith.mulf %122, %24 : vector<2x8x9x4xf32>
    %124 = arith.addf %121, %123 : vector<2x8x9x4xf32>
    %cst_54 = arith.constant 2.000000e+00 : f32
    %125 = vector.broadcast %cst_54 : f32 to vector<2x1x1x4xf32>
    %126 = arith.mulf %125, %105 : vector<2x1x1x4xf32>
    %127 = arith.addf %126, %113 : vector<2x1x1x4xf32>
    %128 = vector.broadcast %127 : vector<2x1x1x4xf32> to vector<2x8x9x4xf32>
    %129 = arith.mulf %128, %31 : vector<2x8x9x4xf32>
    %130 = arith.addf %124, %129 : vector<2x8x9x4xf32>
    %cst_55 = arith.constant 2.000000e+00 : f32
    %131 = vector.broadcast %cst_55 : f32 to vector<2x1x1x4xf32>
    %132 = arith.mulf %131, %109 : vector<2x1x1x4xf32>
    %133 = arith.addf %101, %132 : vector<2x1x1x4xf32>
    %134 = vector.broadcast %133 : vector<2x1x1x4xf32> to vector<2x8x9x4xf32>
    %135 = arith.mulf %134, %10 : vector<2x8x9x4xf32>
    %136 = vector.broadcast %109 : vector<2x1x1x4xf32> to vector<2x8x9x4xf32>
    %137 = arith.mulf %136, %17 : vector<2x8x9x4xf32>
    %138 = arith.addf %135, %137 : vector<2x8x9x4xf32>
    %cst_56 = arith.constant 2.000000e+00 : f32
    %139 = vector.broadcast %cst_56 : f32 to vector<2x1x1x4xf32>
    %140 = arith.mulf %139, %113 : vector<2x1x1x4xf32>
    %141 = arith.addf %105, %140 : vector<2x1x1x4xf32>
    %142 = vector.broadcast %141 : vector<2x1x1x4xf32> to vector<2x8x9x4xf32>
    %143 = arith.mulf %142, %24 : vector<2x8x9x4xf32>
    %144 = arith.addf %138, %143 : vector<2x8x9x4xf32>
    %145 = vector.broadcast %113 : vector<2x1x1x4xf32> to vector<2x8x9x4xf32>
    %146 = arith.mulf %145, %31 : vector<2x8x9x4xf32>
    %147 = arith.addf %144, %146 : vector<2x8x9x4xf32>
    %148 = vector.extract_strided_slice %130 {offsets = [0, 0, 0, 0], sizes = [2, 8, 8, 4], strides = [1, 1, 1, 1]} : vector<2x8x9x4xf32> to vector<2x8x8x4xf32>
    %149 = vector.extract_strided_slice %147 {offsets = [0, 0, 1, 0], sizes = [2, 8, 8, 4], strides = [1, 1, 1, 1]} : vector<2x8x9x4xf32> to vector<2x8x8x4xf32>
    %150 = arith.addf %148, %149 : vector<2x8x8x4xf32>
    %c0_57 = arith.constant 0 : index
    %c0_58 = arith.constant 0 : index
    %c0_59 = arith.constant 0 : index
    %c0_60 = arith.constant 0 : index
    %151 = vector.load %arg9[%c0_57, %c0_58, %c0_59, %c0_60] : memref<2x8x8x4xf32, #tpu.memory_space<vmem>>, vector<2x8x8x4xf32>
    tpu.vector_store %arg9[%c0_57, %c0_58, %c0_59, %c0_60], %150 {strides = array<i32>} : memref<2x8x8x4xf32, #tpu.memory_space<vmem>>, vector<2x8x8x4xf32>,
    return
  }
  func.func @transform_0(%arg0: i32) -> (i32, i32, i32, i32) {
    %c0_i32 = arith.constant 0 : i32
    %c0_i32_0 = arith.constant 0 : i32
    %c0_i32_1 = arith.constant 0 : i32
    %c0_i32_2 = arith.constant 0 : i32
    return %arg0, %c0_i32, %c0_i32_0, %c0_i32_1 : i32, i32, i32, i32
  }
  func.func @transform_1(%arg0: i32) -> (i32, i32, i32, i32) {
    %c0_i32 = arith.constant 0 : i32
    %c0_i32_0 = arith.constant 0 : i32
    %c0_i32_1 = arith.constant 0 : i32
    %c0_i32_2 = arith.constant 0 : i32
    return %arg0, %c0_i32, %c0_i32_0, %c0_i32_1 : i32, i32, i32, i32
  }
  func.func @transform_2(%arg0: i32) -> (i32, i32, i32, i32) {
    %c0_i32 = arith.constant 0 : i32
    %c0_i32_0 = arith.constant 0 : i32
    %c0_i32_1 = arith.constant 0 : i32
    %c0_i32_2 = arith.constant 0 : i32
    return %arg0, %c0_i32, %c0_i32_0, %c0_i32_1 : i32, i32, i32, i32
  }
  func.func @transform_3(%arg0: i32) -> (i32, i32, i32, i32) {
    %c0_i32 = arith.constant 0 : i32
    %c0_i32_0 = arith.constant 0 : i32
    %c0_i32_1 = arith.constant 0 : i32
    %c0_i32_2 = arith.constant 0 : i32
    return %arg0, %c0_i32, %c0_i32_0, %c0_i32_1 : i32, i32, i32, i32
  }
  func.func @transform_4(%arg0: i32) -> (i32, i32) {
    %c0_i32 = arith.constant 0 : i32
    %c0_i32_0 = arith.constant 0 : i32
    %c0_i32_1 = arith.constant 0 : i32
    return %c0_i32, %c0_i32_0 : i32, i32
  }
  func.func @transform_5(%arg0: i32) -> (i32, i32) {
    %c0_i32 = arith.constant 0 : i32
    %c0_i32_0 = arith.constant 0 : i32
    %c0_i32_1 = arith.constant 0 : i32
    return %c0_i32, %c0_i32_0 : i32, i32
  }
  func.func @transform_6(%arg0: i32) -> (i32, i32) {
    %c0_i32 = arith.constant 0 : i32
    %c0_i32_0 = arith.constant 0 : i32
    %c0_i32_1 = arith.constant 0 : i32
    return %c0_i32, %c0_i32_0 : i32, i32
  }
  func.func @transform_7(%arg0: i32) -> (i32, i32) {
    %c0_i32 = arith.constant 0 : i32
    %c0_i32_0 = arith.constant 0 : i32
    %c0_i32_1 = arith.constant 0 : i32
    return %c0_i32, %c0_i32_0 : i32, i32
  }
  func.func @transform_8(%arg0: i32) -> (i32, i32, i32, i32) {
    %c0_i32 = arith.constant 0 : i32
    %c0_i32_0 = arith.constant 0 : i32
    %c0_i32_1 = arith.constant 0 : i32
    %c0_i32_2 = arith.constant 0 : i32
    return %arg0, %c0_i32, %c0_i32_0, %c0_i32_1 : i32, i32, i32, i32
  }
}

</mosaic_0001>

<llo_original>
// kernel: tpu_custom_call.1
$region0: #{tpu_custom_call.1}
  #allocation0 [shape = 'u32[]', space=smem, size = 0x4, offset = 0x4, fixed_abs, tag = 'smem constant byte address 0x4 - core index']
  #allocation1 [shape = 'u32[144,128]{1,0:T(1,128)}', space=vmem, size = 0x12000, scoped, tag = 'internal scratch']
  %s0 = inlined_call_operand.vmem [shape: f32[2,9,9,4], index: 0, kind: input, shape index: {}]
  %s1 = inlined_call_operand.vmem [shape: f32[2,9,9,4], index: 1, kind: input, shape index: {}]
  %s2 = inlined_call_operand.vmem [shape: f32[2,9,9,4], index: 2, kind: input, shape index: {}]
  %s3 = inlined_call_operand.vmem [shape: f32[2,9,9,4], index: 3, kind: input, shape index: {}]
  %s4 = inlined_call_operand.vmem [shape: f32[16,4], index: 4, kind: input, shape index: {}]
  %s5 = inlined_call_operand.vmem [shape: f32[1,4], index: 5, kind: input, shape index: {}]
  %s6 = inlined_call_operand.vmem [shape: f32[4,16], index: 6, kind: input, shape index: {}]
  %s7 = inlined_call_operand.vmem [shape: f32[1,16], index: 7, kind: input, shape index: {}]
  %s8 = inlined_call_operand.vmem [shape: f32[2,8,8,4], index: 8, kind: output, shape index: {}]
  %s9 = sld [smem:[#allocation0]]
  $region42: #{tpu_custom_call.1} parent=0
    _
  %s11 = ssub.s32 1, %s9
  %s12 = scalar_select 0, %s11, %s9
  // Predicated region
  $region2: #{tpu_custom_call.1} parent=0 // pred_check
    _
  $region3: #{tpu_custom_call.1} parent=0 // pred_check_branch
    %14 = sbr.rel (0) target = $region5
  $region4: #{tpu_custom_call.1} parent=0 // pred_region
    _
  $region5: #{tpu_custom_call.1} parent=0 // pred_fallthru
    _
  // Predicated region
  $region6: #{tpu_custom_call.1} parent=0 // pred_check
    _
  $region7: #{tpu_custom_call.1} parent=0 // pred_check_branch
    %16 = sbr.rel (0) target = $region9
  $region8: #{tpu_custom_call.1} parent=0 // pred_region
    _
  $region9: #{tpu_custom_call.1} parent=0 // pred_fallthru
    _
  // Predicated region
  $region10: #{tpu_custom_call.1} parent=0 // pred_check
    _
  $region11: #{tpu_custom_call.1} parent=0 // pred_check_branch
    %18 = sbr.rel (0) target = $region13
  $region12: #{tpu_custom_call.1} parent=0 // pred_region
    _
  $region13: #{tpu_custom_call.1} parent=0 // pred_fallthru
    _
  // Predicated region
  $region14: #{tpu_custom_call.1} parent=0 // pred_check
    _
  $region15: #{tpu_custom_call.1} parent=0 // pred_check_branch
    %20 = sbr.rel (0) target = $region17
  $region16: #{tpu_custom_call.1} parent=0 // pred_region
    _
  $region17: #{tpu_custom_call.1} parent=0 // pred_fallthru
    _
  // Predicated region
  $region18: #{tpu_custom_call.1} parent=0 // pred_check
    _
  $region19: #{tpu_custom_call.1} parent=0 // pred_check_branch
    %22 = sbr.rel (0) target = $region21
  $region20: #{tpu_custom_call.1} parent=0 // pred_region
    _
  $region21: #{tpu_custom_call.1} parent=0 // pred_fallthru
    _
  // Predicated region
  $region22: #{tpu_custom_call.1} parent=0 // pred_check
    _
  $region23: #{tpu_custom_call.1} parent=0 // pred_check_branch
    %24 = sbr.rel (0) target = $region25
  $region24: #{tpu_custom_call.1} parent=0 // pred_region
    _
  $region25: #{tpu_custom_call.1} parent=0 // pred_fallthru
    _
  // Predicated region
  $region26: #{tpu_custom_call.1} parent=0 // pred_check
    _
  $region27: #{tpu_custom_call.1} parent=0 // pred_check_branch
    %26 = sbr.rel (0) target = $region29
  $region28: #{tpu_custom_call.1} parent=0 // pred_region
    _
  $region29: #{tpu_custom_call.1} parent=0 // pred_fallthru
    _
  // Predicated region
  $region30: #{tpu_custom_call.1} parent=0 // pred_check
    _
  $region31: #{tpu_custom_call.1} parent=0 // pred_check_branch
    %28 = sbr.rel (0) target = $region33
  $region32: #{tpu_custom_call.1} parent=0 // pred_region
    _
  $region33: #{tpu_custom_call.1} parent=0 // pred_fallthru
    _
  %v29 = vld [vmem:[%s0] sm:$0xff]
  %v30 = vld [vmem:[%s0 + $0x8] sm:$0x1]
  %v31 = vld [vmem:[%s0 + $0x10] sm:$0xff]
  %v32 = vld [vmem:[%s0 + $0x18] sm:$0x1]
  %v33 = vld [vmem:[%s0 + $0x20] sm:$0xff]
  %v34 = vld [vmem:[%s0 + $0x28] sm:$0x1]
  %v35 = vld [vmem:[%s0 + $0x30] sm:$0xff]
  %v36 = vld [vmem:[%s0 + $0x38] sm:$0x1]
  %v37 = vld [vmem:[%s0 + $0x40] sm:$0xff]
  %v38 = vld [vmem:[%s0 + $0x48] sm:$0x1]
  %v39 = vld [vmem:[%s0 + $0x50] sm:$0xff]
  %v40 = vld [vmem:[%s0 + $0x58] sm:$0x1]
  %v41 = vld [vmem:[%s0 + $0x60] sm:$0xff]
  %v42 = vld [vmem:[%s0 + $0x68] sm:$0x1]
  %v43 = vld [vmem:[%s0 + $0x70] sm:$0xff]
  %v44 = vld [vmem:[%s0 + $0x78] sm:$0x1]
  %v45 = vld [vmem:[%s0 + $0x80] sm:$0xff]
  %v46 = vld [vmem:[%s0 + $0x88] sm:$0x1]
  %v47 = vld [vmem:[%s0 + $0x90] sm:$0xff]
  %v48 = vld [vmem:[%s0 + $0x98] sm:$0x1]
  %v49 = vld [vmem:[%s0 + $0xa0] sm:$0xff]
  %v50 = vld [vmem:[%s0 + $0xa8] sm:$0x1]
  %v51 = vld [vmem:[%s0 + $0xb0] sm:$0xff]
  %v52 = vld [vmem:[%s0 + $0xb8] sm:$0x1]
  %v53 = vld [vmem:[%s0 + $0xc0] sm:$0xff]
  %v54 = vld [vmem:[%s0 + $0xc8] sm:$0x1]
  %v55 = vld [vmem:[%s0 + $0xd0] sm:$0xff]
  %v56 = vld [vmem:[%s0 + $0xd8] sm:$0x1]
  %v57 = vld [vmem:[%s0 + $0xe0] sm:$0xff]
  %v58 = vld [vmem:[%s0 + $0xe8] sm:$0x1]
  %v59 = vld [vmem:[%s0 + $0xf0] sm:$0xff]
  %v60 = vld [vmem:[%s0 + $0xf8] sm:$0x1]
  %v61 = vld [vmem:[%s0 + $0x100] sm:$0xff]
  %v62 = vld [vmem:[%s0 + $0x108] sm:$0x1]
  %v63 = vld [vmem:[%s0 + $0x110] sm:$0xff]
  %v64 = vld [vmem:[%s0 + $0x118] sm:$0x1]
  %v65 = vld [vmem:[%s1] sm:$0xff]
  %v66 = vld [vmem:[%s1 + $0x8] sm:$0x1]
  %v67 = vld [vmem:[%s1 + $0x10] sm:$0xff]
  %v68 = vld [vmem:[%s1 + $0x18] sm:$0x1]
  %v69 = vld [vmem:[%s1 + $0x20] sm:$0xff]
  %v70 = vld [vmem:[%s1 + $0x28] sm:$0x1]
  %v71 = vld [vmem:[%s1 + $0x30] sm:$0xff]
  %v72 = vld [vmem:[%s1 + $0x38] sm:$0x1]
  %v73 = vld [vmem:[%s1 + $0x40] sm:$0xff]
  %v74 = vld [vmem:[%s1 + $0x48] sm:$0x1]
  %v75 = vld [vmem:[%s1 + $0x50] sm:$0xff]
  %v76 = vld [vmem:[%s1 + $0x58] sm:$0x1]
  %v77 = vld [vmem:[%s1 + $0x60] sm:$0xff]
  %v78 = vld [vmem:[%s1 + $0x68] sm:$0x1]
  %v79 = vld [vmem:[%s1 + $0x70] sm:$0xff]
  %v80 = vld [vmem:[%s1 + $0x78] sm:$0x1]
  %v81 = vld [vmem:[%s1 + $0x80] sm:$0xff]
  %v82 = vld [vmem:[%s1 + $0x88] sm:$0x1]
  %v83 = vld [vmem:[%s1 + $0x90] sm:$0xff]
  %v84 = vld [vmem:[%s1 + $0x98] sm:$0x1]
  %v85 = vld [vmem:[%s1 + $0xa0] sm:$0xff]
  %v86 = vld [vmem:[%s1 + $0xa8] sm:$0x1]
  %v87 = vld [vmem:[%s1 + $0xb0] sm:$0xff]
  %v88 = vld [vmem:[%s1 + $0xb8] sm:$0x1]
  %v89 = vld [vmem:[%s1 + $0xc0] sm:$0xff]
  %v90 = vld [vmem:[%s1 + $0xc8] sm:$0x1]
  %v91 = vld [vmem:[%s1 + $0xd0] sm:$0xff]
  %v92 = vld [vmem:[%s1 + $0xd8] sm:$0x1]
  %v93 = vld [vmem:[%s1 + $0xe0] sm:$0xff]
  %v94 = vld [vmem:[%s1 + $0xe8] sm:$0x1]
  %v95 = vld [vmem:[%s1 + $0xf0] sm:$0xff]
  %v96 = vld [vmem:[%s1 + $0xf8] sm:$0x1]
  %v97 = vld [vmem:[%s1 + $0x100] sm:$0xff]
  %v98 = vld [vmem:[%s1 + $0x108] sm:$0x1]
  %v99 = vld [vmem:[%s1 + $0x110] sm:$0xff]
  %v100 = vld [vmem:[%s1 + $0x118] sm:$0x1]
  %v101 = vld [vmem:[%s2] sm:$0xff]
  %v102 = vld [vmem:[%s2 + $0x8] sm:$0x1]
  %v103 = vld [vmem:[%s2 + $0x10] sm:$0xff]
  %v104 = vld [vmem:[%s2 + $0x18] sm:$0x1]
  %v105 = vld [vmem:[%s2 + $0x20] sm:$0xff]
  %v106 = vld [vmem:[%s2 + $0x28] sm:$0x1]
  %v107 = vld [vmem:[%s2 + $0x30] sm:$0xff]
  %v108 = vld [vmem:[%s2 + $0x38] sm:$0x1]
  %v109 = vld [vmem:[%s2 + $0x40] sm:$0xff]
  %v110 = vld [vmem:[%s2 + $0x48] sm:$0x1]
  %v111 = vld [vmem:[%s2 + $0x50] sm:$0xff]
  %v112 = vld [vmem:[%s2 + $0x58] sm:$0x1]
  %v113 = vld [vmem:[%s2 + $0x60] sm:$0xff]
  %v114 = vld [vmem:[%s2 + $0x68] sm:$0x1]
  %v115 = vld [vmem:[%s2 + $0x70] sm:$0xff]
  %v116 = vld [vmem:[%s2 + $0x78] sm:$0x1]
  %v117 = vld [vmem:[%s2 + $0x80] sm:$0xff]
  %v118 = vld [vmem:[%s2 + $0x88] sm:$0x1]
  %v119 = vld [vmem:[%s2 + $0x90] sm:$0xff]
  %v120 = vld [vmem:[%s2 + $0x98] sm:$0x1]
  %v121 = vld [vmem:[%s2 + $0xa0] sm:$0xff]
  %v122 = vld [vmem:[%s2 + $0xa8] sm:$0x1]
  %v123 = vld [vmem:[%s2 + $0xb0] sm:$0xff]
  %v124 = vld [vmem:[%s2 + $0xb8] sm:$0x1]
  %v125 = vld [vmem:[%s2 + $0xc0] sm:$0xff]
  %v126 = vld [vmem:[%s2 + $0xc8] sm:$0x1]
  %v127 = vld [vmem:[%s2 + $0xd0] sm:$0xff]
  %v128 = vld [vmem:[%s2 + $0xd8] sm:$0x1]
  %v129 = vld [vmem:[%s2 + $0xe0] sm:$0xff]
  %v130 = vld [vmem:[%s2 + $0xe8] sm:$0x1]
  %v131 = vld [vmem:[%s2 + $0xf0] sm:$0xff]
  %v132 = vld [vmem:[%s2 + $0xf8] sm:$0x1]
  %v133 = vld [vmem:[%s2 + $0x100] sm:$0xff]
  %v134 = vld [vmem:[%s2 + $0x108] sm:$0x1]
  %v135 = vld [vmem:[%s2 + $0x110] sm:$0xff]
  %v136 = vld [vmem:[%s2 + $0x118] sm:$0x1]
  %v137 = vld [vmem:[%s3] sm:$0xff]
  %v138 = vld [vmem:[%s3 + $0x8] sm:$0x1]
  %v139 = vld [vmem:[%s3 + $0x10] sm:$0xff]
  %v140 = vld [vmem:[%s3 + $0x18] sm:$0x1]
  %v141 = vld [vmem:[%s3 + $0x20] sm:$0xff]
  %v142 = vld [vmem:[%s3 + $0x28] sm:$0x1]
  %v143 = vld [vmem:[%s3 + $0x30] sm:$0xff]
  %v144 = vld [vmem:[%s3 + $0x38] sm:$0x1]
  %v145 = vld [vmem:[%s3 + $0x40] sm:$0xff]
  %v146 = vld [vmem:[%s3 + $0x48] sm:$0x1]
  %v147 = vld [vmem:[%s3 + $0x50] sm:$0xff]
  %v148 = vld [vmem:[%s3 + $0x58] sm:$0x1]
  %v149 = vld [vmem:[%s3 + $0x60] sm:$0xff]
  %v150 = vld [vmem:[%s3 + $0x68] sm:$0x1]
  %v151 = vld [vmem:[%s3 + $0x70] sm:$0xff]
  %v152 = vld [vmem:[%s3 + $0x78] sm:$0x1]
  %v153 = vld [vmem:[%s3 + $0x80] sm:$0xff]
  %v154 = vld [vmem:[%s3 + $0x88] sm:$0x1]
  %v155 = vld [vmem:[%s3 + $0x90] sm:$0xff]
  %v156 = vld [vmem:[%s3 + $0x98] sm:$0x1]
  %v157 = vld [vmem:[%s3 + $0xa0] sm:$0xff]
  %v158 = vld [vmem:[%s3 + $0xa8] sm:$0x1]
  %v159 = vld [vmem:[%s3 + $0xb0] sm:$0xff]
  %v160 = vld [vmem:[%s3 + $0xb8] sm:$0x1]
  %v161 = vld [vmem:[%s3 + $0xc0] sm:$0xff]
  %v162 = vld [vmem:[%s3 + $0xc8] sm:$0x1]
  %v163 = vld [vmem:[%s3 + $0xd0] sm:$0xff]
  %v164 = vld [vmem:[%s3 + $0xd8] sm:$0x1]
  %v165 = vld [vmem:[%s3 + $0xe0] sm:$0xff]
  %v166 = vld [vmem:[%s3 + $0xe8] sm:$0x1]
  %v167 = vld [vmem:[%s3 + $0xf0] sm:$0xff]
  %v168 = vld [vmem:[%s3 + $0xf8] sm:$0x1]
  %v169 = vld [vmem:[%s3 + $0x100] sm:$0xff]
  %v170 = vld [vmem:[%s3 + $0x108] sm:$0x1]
  %v171 = vld [vmem:[%s3 + $0x110] sm:$0xff]
  %v172 = vld [vmem:[%s3 + $0x118] sm:$0x1]
  %v173 = vmul.f32 %v101, 2.0
  %v174 = vmul.f32 %v102, 2.0
  %v175 = vmul.f32 %v103, 2.0
  %v176 = vmul.f32 %v104, 2.0
  %v177 = vmul.f32 %v105, 2.0
  %v178 = vmul.f32 %v106, 2.0
  %v179 = vmul.f32 %v107, 2.0
  %v180 = vmul.f32 %v108, 2.0
  %v181 = vmul.f32 %v109, 2.0
  %v182 = vmul.f32 %v110, 2.0
  %v183 = vmul.f32 %v111, 2.0
  %v184 = vmul.f32 %v112, 2.0
  %v185 = vmul.f32 %v113, 2.0
  %v186 = vmul.f32 %v114, 2.0
  %v187 = vmul.f32 %v115, 2.0
  %v188 = vmul.f32 %v116, 2.0
  %v189 = vmul.f32 %v119, 2.0
  %v190 = vmul.f32 %v120, 2.0
  %v191 = vmul.f32 %v121, 2.0
  %v192 = vmul.f32 %v122, 2.0
  %v193 = vmul.f32 %v123, 2.0
  %v194 = vmul.f32 %v124, 2.0
  %v195 = vmul.f32 %v125, 2.0
  %v196 = vmul.f32 %v126, 2.0
  %v197 = vmul.f32 %v127, 2.0
  %v198 = vmul.f32 %v128, 2.0
  %v199 = vmul.f32 %v129, 2.0
  %v200 = vmul.f32 %v130, 2.0
  %v201 = vmul.f32 %v131, 2.0
  %v202 = vmul.f32 %v132, 2.0
  %v203 = vmul.f32 %v133, 2.0
  %v204 = vmul.f32 %v134, 2.0
  %v205 = vadd.f32 %v29, %v173
  %v206 = vadd.f32 %v30, %v174
  %v207 = vadd.f32 %v31, %v175
  %v208 = vadd.f32 %v32, %v176
  %v209 = vadd.f32 %v33, %v177
  %v210 = vadd.f32 %v34, %v178
  %v211 = vadd.f32 %v35, %v179
  %v212 = vadd.f32 %v36, %v180
  %v213 = vadd.f32 %v37, %v181
  %v214 = vadd.f32 %v38, %v182
  %v215 = vadd.f32 %v39, %v183
  %v216 = vadd.f32 %v40, %v184
  %v217 = vadd.f32 %v41, %v185
  %v218 = vadd.f32 %v42, %v186
  %v219 = vadd.f32 %v43, %v187
  %v220 = vadd.f32 %v44, %v188
  %v221 = vadd.f32 %v47, %v189
  %v222 = vadd.f32 %v48, %v190
  %v223 = vadd.f32 %v49, %v191
  %v224 = vadd.f32 %v50, %v192
  %v225 = vadd.f32 %v51, %v193
  %v226 = vadd.f32 %v52, %v194
  %v227 = vadd.f32 %v53, %v195
  %v228 = vadd.f32 %v54, %v196
  %v229 = vadd.f32 %v55, %v197
  %v230 = vadd.f32 %v56, %v198
  %v231 = vadd.f32 %v57, %v199
  %v232 = vadd.f32 %v58, %v200
  %v233 = vadd.f32 %v59, %v201
  %v234 = vadd.f32 %v60, %v202
  %v235 = vadd.f32 %v61, %v203
  %v236 = vadd.f32 %v62, %v204
  %v237 = vadd.f32 %v205, %v31
  %v238 = vadd.f32 %v206, %v32
  %v239 = vadd.f32 %v207, %v33
  %v240 = vadd.f32 %v208, %v34
  %v241 = vadd.f32 %v209, %v35
  %v242 = vadd.f32 %v210, %v36
  %v243 = vadd.f32 %v211, %v37
  %v244 = vadd.f32 %v212, %v38
  %v245 = vadd.f32 %v213, %v39
  %v246 = vadd.f32 %v214, %v40
  %v247 = vadd.f32 %v215, %v41
  %v248 = vadd.f32 %v216, %v42
  %v249 = vadd.f32 %v217, %v43
  %v250 = vadd.f32 %v218, %v44
  %v251 = vadd.f32 %v219, %v45
  %v252 = vadd.f32 %v220, %v46
  %v253 = vadd.f32 %v221, %v49
  %v254 = vadd.f32 %v222, %v50
  %v255 = vadd.f32 %v223, %v51
  %v256 = vadd.f32 %v224, %v52
  %v257 = vadd.f32 %v225, %v53
  %v258 = vadd.f32 %v226, %v54
  %v259 = vadd.f32 %v227, %v55
  %v260 = vadd.f32 %v228, %v56
  %v261 = vadd.f32 %v229, %v57
  %v262 = vadd.f32 %v230, %v58
  %v263 = vadd.f32 %v231, %v59
  %v264 = vadd.f32 %v232, %v60
  %v265 = vadd.f32 %v233, %v61
  %v266 = vadd.f32 %v234, %v62
  %v267 = vadd.f32 %v235, %v63
  %v268 = vadd.f32 %v236, %v64
  %v269 = vmul.f32 %v137, 2.0
  %v270 = vmul.f32 %v138, 2.0
  %v271 = vmul.f32 %v139, 2.0
  %v272 = vmul.f32 %v140, 2.0
  %v273 = vmul.f32 %v141, 2.0
  %v274 = vmul.f32 %v142, 2.0
  %v275 = vmul.f32 %v143, 2.0
  %v276 = vmul.f32 %v144, 2.0
  %v277 = vmul.f32 %v145, 2.0
  %v278 = vmul.f32 %v146, 2.0
  %v279 = vmul.f32 %v147, 2.0
  %v280 = vmul.f32 %v148, 2.0
  %v281 = vmul.f32 %v149, 2.0
  %v282 = vmul.f32 %v150, 2.0
  %v283 = vmul.f32 %v151, 2.0
  %v284 = vmul.f32 %v152, 2.0
  %v285 = vmul.f32 %v155, 2.0
  %v286 = vmul.f32 %v156, 2.0
  %v287 = vmul.f32 %v157, 2.0
  %v288 = vmul.f32 %v158, 2.0
  %v289 = vmul.f32 %v159, 2.0
  %v290 = vmul.f32 %v160, 2.0
  %v291 = vmul.f32 %v161, 2.0
  %v292 = vmul.f32 %v162, 2.0
  %v293 = vmul.f32 %v163, 2.0
  %v294 = vmul.f32 %v164, 2.0
  %v295 = vmul.f32 %v165, 2.0
  %v296 = vmul.f32 %v166, 2.0
  %v297 = vmul.f32 %v167, 2.0
  %v298 = vmul.f32 %v168, 2.0
  %v299 = vmul.f32 %v169, 2.0
  %v300 = vmul.f32 %v170, 2.0
  %v301 = vadd.f32 %v65, %v269
  %v302 = vadd.f32 %v66, %v270
  %v303 = vadd.f32 %v67, %v271
  %v304 = vadd.f32 %v68, %v272
  %v305 = vadd.f32 %v69, %v273
  %v306 = vadd.f32 %v70, %v274
  %v307 = vadd.f32 %v71, %v275
  %v308 = vadd.f32 %v72, %v276
  %v309 = vadd.f32 %v73, %v277
  %v310 = vadd.f32 %v74, %v278
  %v311 = vadd.f32 %v75, %v279
  %v312 = vadd.f32 %v76, %v280
  %v313 = vadd.f32 %v77, %v281
  %v314 = vadd.f32 %v78, %v282
  %v315 = vadd.f32 %v79, %v283
  %v316 = vadd.f32 %v80, %v284
  %v317 = vadd.f32 %v83, %v285
  %v318 = vadd.f32 %v84, %v286
  %v319 = vadd.f32 %v85, %v287
  %v320 = vadd.f32 %v86, %v288
  %v321 = vadd.f32 %v87, %v289
  %v322 = vadd.f32 %v88, %v290
  %v323 = vadd.f32 %v89, %v291
  %v324 = vadd.f32 %v90, %v292
  %v325 = vadd.f32 %v91, %v293
  %v326 = vadd.f32 %v92, %v294
  %v327 = vadd.f32 %v93, %v295
  %v328 = vadd.f32 %v94, %v296
  %v329 = vadd.f32 %v95, %v297
  %v330 = vadd.f32 %v96, %v298
  %v331 = vadd.f32 %v97, %v299
  %v332 = vadd.f32 %v98, %v300
  %v333 = vadd.f32 %v301, %v67
  %v334 = vadd.f32 %v302, %v68
  %v335 = vadd.f32 %v303, %v69
  %v336 = vadd.f32 %v304, %v70
  %v337 = vadd.f32 %v305, %v71
  %v338 = vadd.f32 %v306, %v72
  %v339 = vadd.f32 %v307, %v73
  %v340 = vadd.f32 %v308, %v74
  %v341 = vadd.f32 %v309, %v75
  %v342 = vadd.f32 %v310, %v76
  %v343 = vadd.f32 %v311, %v77
  %v344 = vadd.f32 %v312, %v78
  %v345 = vadd.f32 %v313, %v79
  %v346 = vadd.f32 %v314, %v80
  %v347 = vadd.f32 %v315, %v81
  %v348 = vadd.f32 %v316, %v82
  %v349 = vadd.f32 %v317, %v85
  %v350 = vadd.f32 %v318, %v86
  %v351 = vadd.f32 %v319, %v87
  %v352 = vadd.f32 %v320, %v88
  %v353 = vadd.f32 %v321, %v89
  %v354 = vadd.f32 %v322, %v90
  %v355 = vadd.f32 %v323, %v91
  %v356 = vadd.f32 %v324, %v92
  %v357 = vadd.f32 %v325, %v93
  %v358 = vadd.f32 %v326, %v94
  %v359 = vadd.f32 %v327, %v95
  %v360 = vadd.f32 %v328, %v96
  %v361 = vadd.f32 %v329, %v97
  %v362 = vadd.f32 %v330, %v98
  %v363 = vadd.f32 %v331, %v99
  %v364 = vadd.f32 %v332, %v100
  %v365 = vmul.f32 %v31, 2.0
  %v366 = vmul.f32 %v32, 2.0
  %v367 = vmul.f32 %v33, 2.0
  %v368 = vmul.f32 %v34, 2.0
  %v369 = vmul.f32 %v35, 2.0
  %v370 = vmul.f32 %v36, 2.0
  %v371 = vmul.f32 %v37, 2.0
  %v372 = vmul.f32 %v38, 2.0
  %v373 = vmul.f32 %v39, 2.0
  %v374 = vmul.f32 %v40, 2.0
  %v375 = vmul.f32 %v41, 2.0
  %v376 = vmul.f32 %v42, 2.0
  %v377 = vmul.f32 %v43, 2.0
  %v378 = vmul.f32 %v44, 2.0
  %v379 = vmul.f32 %v45, 2.0
  %v380 = vmul.f32 %v46, 2.0
  %v381 = vmul.f32 %v49, 2.0
  %v382 = vmul.f32 %v50, 2.0
  %v383 = vmul.f32 %v51, 2.0
  %v384 = vmul.f32 %v52, 2.0
  %v385 = vmul.f32 %v53, 2.0
  %v386 = vmul.f32 %v54, 2.0
  %v387 = vmul.f32 %v55, 2.0
  %v388 = vmul.f32 %v56, 2.0
  %v389 = vmul.f32 %v57, 2.0
  %v390 = vmul.f32 %v58, 2.0
  %v391 = vmul.f32 %v59, 2.0
  %v392 = vmul.f32 %v60, 2.0
  %v393 = vmul.f32 %v61, 2.0
  %v394 = vmul.f32 %v62, 2.0
  %v395 = vmul.f32 %v63, 2.0
  %v396 = vmul.f32 %v64, 2.0
  %v397 = vadd.f32 %v101, %v365
  %v398 = vadd.f32 %v102, %v366
  %v399 = vadd.f32 %v103, %v367
  %v400 = vadd.f32 %v104, %v368
  %v401 = vadd.f32 %v105, %v369
  %v402 = vadd.f32 %v106, %v370
  %v403 = vadd.f32 %v107, %v371
  %v404 = vadd.f32 %v108, %v372
  %v405 = vadd.f32 %v109, %v373
  %v406 = vadd.f32 %v110, %v374
  %v407 = vadd.f32 %v111, %v375
  %v408 = vadd.f32 %v112, %v376
  %v409 = vadd.f32 %v113, %v377
  %v410 = vadd.f32 %v114, %v378
  %v411 = vadd.f32 %v115, %v379
  %v412 = vadd.f32 %v116, %v380
  %v413 = vadd.f32 %v119, %v381
  %v414 = vadd.f32 %v120, %v382
  %v415 = vadd.f32 %v121, %v383
  %v416 = vadd.f32 %v122, %v384
  %v417 = vadd.f32 %v123, %v385
  %v418 = vadd.f32 %v124, %v386
  %v419 = vadd.f32 %v125, %v387
  %v420 = vadd.f32 %v126, %v388
  %v421 = vadd.f32 %v127, %v389
  %v422 = vadd.f32 %v128, %v390
  %v423 = vadd.f32 %v129, %v391
  %v424 = vadd.f32 %v130, %v392
  %v425 = vadd.f32 %v131, %v393
  %v426 = vadd.f32 %v132, %v394
  %v427 = vadd.f32 %v133, %v395
  %v428 = vadd.f32 %v134, %v396
  %v429 = vadd.f32 %v397, %v103
  %v430 = vadd.f32 %v398, %v104
  %v431 = vadd.f32 %v399, %v105
  %v432 = vadd.f32 %v400, %v106
  %v433 = vadd.f32 %v401, %v107
  %v434 = vadd.f32 %v402, %v108
  %v435 = vadd.f32 %v403, %v109
  %v436 = vadd.f32 %v404, %v110
  %v437 = vadd.f32 %v405, %v111
  %v438 = vadd.f32 %v406, %v112
  %v439 = vadd.f32 %v407, %v113
  %v440 = vadd.f32 %v408, %v114
  %v441 = vadd.f32 %v409, %v115
  %v442 = vadd.f32 %v410, %v116
  %v443 = vadd.f32 %v411, %v117
  %v444 = vadd.f32 %v412, %v118
  %v445 = vadd.f32 %v413, %v121
  %v446 = vadd.f32 %v414, %v122
  %v447 = vadd.f32 %v415, %v123
  %v448 = vadd.f32 %v416, %v124
  %v449 = vadd.f32 %v417, %v125
  %v450 = vadd.f32 %v418, %v126
  %v451 = vadd.f32 %v419, %v127
  %v452 = vadd.f32 %v420, %v128
  %v453 = vadd.f32 %v421, %v129
  %v454 = vadd.f32 %v422, %v130
  %v455 = vadd.f32 %v423, %v131
  %v456 = vadd.f32 %v424, %v132
  %v457 = vadd.f32 %v425, %v133
  %v458 = vadd.f32 %v426, %v134
  %v459 = vadd.f32 %v427, %v135
  %v460 = vadd.f32 %v428, %v136
  %v461 = vmul.f32 %v67, 2.0
  %v462 = vmul.f32 %v68, 2.0
  %v463 = vmul.f32 %v69, 2.0
  %v464 = vmul.f32 %v70, 2.0
  %v465 = vmul.f32 %v71, 2.0
  %v466 = vmul.f32 %v72, 2.0
  %v467 = vmul.f32 %v73, 2.0
  %v468 = vmul.f32 %v74, 2.0
  %v469 = vmul.f32 %v75, 2.0
  %v470 = vmul.f32 %v76, 2.0
  %v471 = vmul.f32 %v77, 2.0
  %v472 = vmul.f32 %v78, 2.0
  %v473 = vmul.f32 %v79, 2.0
  %v474 = vmul.f32 %v80, 2.0
  %v475 = vmul.f32 %v81, 2.0
  %v476 = vmul.f32 %v82, 2.0
  %v477 = vmul.f32 %v85, 2.0
  %v478 = vmul.f32 %v86, 2.0
  %v479 = vmul.f32 %v87, 2.0
  %v480 = vmul.f32 %v88, 2.0
  %v481 = vmul.f32 %v89, 2.0
  %v482 = vmul.f32 %v90, 2.0
  %v483 = vmul.f32 %v91, 2.0
  %v484 = vmul.f32 %v92, 2.0
  %v485 = vmul.f32 %v93, 2.0
  %v486 = vmul.f32 %v94, 2.0
  %v487 = vmul.f32 %v95, 2.0
  %v488 = vmul.f32 %v96, 2.0
  %v489 = vmul.f32 %v97, 2.0
  %v490 = vmul.f32 %v98, 2.0
  %v491 = vmul.f32 %v99, 2.0
  %v492 = vmul.f32 %v100, 2.0
  %v493 = vadd.f32 %v137, %v461
  %v494 = vadd.f32 %v138, %v462
  %v495 = vadd.f32 %v139, %v463
  %v496 = vadd.f32 %v140, %v464
  %v497 = vadd.f32 %v141, %v465
  %v498 = vadd.f32 %v142, %v466
  %v499 = vadd.f32 %v143, %v467
  %v500 = vadd.f32 %v144, %v468
  %v501 = vadd.f32 %v145, %v469
  %v502 = vadd.f32 %v146, %v470
  %v503 = vadd.f32 %v147, %v471
  %v504 = vadd.f32 %v148, %v472
  %v505 = vadd.f32 %v149, %v473
  %v506 = vadd.f32 %v150, %v474
  %v507 = vadd.f32 %v151, %v475
  %v508 = vadd.f32 %v152, %v476
  %v509 = vadd.f32 %v155, %v477
  %v510 = vadd.f32 %v156, %v478
  %v511 = vadd.f32 %v157, %v479
  %v512 = vadd.f32 %v158, %v480
  %v513 = vadd.f32 %v159, %v481
  %v514 = vadd.f32 %v160, %v482
  %v515 = vadd.f32 %v161, %v483
  %v516 = vadd.f32 %v162, %v484
  %v517 = vadd.f32 %v163, %v485
  %v518 = vadd.f32 %v164, %v486
  %v519 = vadd.f32 %v165, %v487
  %v520 = vadd.f32 %v166, %v488
  %v521 = vadd.f32 %v167, %v489
  %v522 = vadd.f32 %v168, %v490
  %v523 = vadd.f32 %v169, %v491
  %v524 = vadd.f32 %v170, %v492
  %v525 = vadd.f32 %v493, %v139
  %v526 = vadd.f32 %v494, %v140
  %v527 = vadd.f32 %v495, %v141
  %v528 = vadd.f32 %v496, %v142
  %v529 = vadd.f32 %v497, %v143
  %v530 = vadd.f32 %v498, %v144
  %v531 = vadd.f32 %v499, %v145
  %v532 = vadd.f32 %v500, %v146
  %v533 = vadd.f32 %v501, %v147
  %v534 = vadd.f32 %v502, %v148
  %v535 = vadd.f32 %v503, %v149
  %v536 = vadd.f32 %v504, %v150
  %v537 = vadd.f32 %v505, %v151
  %v538 = vadd.f32 %v506, %v152
  %v539 = vadd.f32 %v507, %v153
  %v540 = vadd.f32 %v508, %v154
  %v541 = vadd.f32 %v509, %v157
  %v542 = vadd.f32 %v510, %v158
  %v543 = vadd.f32 %v511, %v159
  %v544 = vadd.f32 %v512, %v160
  %v545 = vadd.f32 %v513, %v161
  %v546 = vadd.f32 %v514, %v162
  %v547 = vadd.f32 %v515, %v163
  %v548 = vadd.f32 %v516, %v164
  %v549 = vadd.f32 %v517, %v165
  %v550 = vadd.f32 %v518, %v166
  %v551 = vadd.f32 %v519, %v167
  %v552 = vadd.f32 %v520, %v168
  %v553 = vadd.f32 %v521, %v169
  %v554 = vadd.f32 %v522, %v170
  %v555 = vadd.f32 %v523, %v171
  %v556 = vadd.f32 %v524, %v172
  %vm557 = vcmask 31744
  %v558 = vsel %vm557, %v237, 0.0
  %vm559 = vcmask 24576
  %v560 = vsel %vm559, %v238, 0.0
  %v561 = vadd.f32 %v558, %v560
  %v562 = vsel %vm557, %v239, 0.0
  %v563 = vadd.f32 %v561, %v562
  %v564 = vsel %vm559, %v240, 0.0
  %v565 = vadd.f32 %v563, %v564
  %v566 = vsel %vm557, %v241, 0.0
  %v567 = vadd.f32 %v565, %v566
  %v568 = vsel %vm559, %v242, 0.0
  %v569 = vadd.f32 %v567, %v568
  %v570 = vsel %vm557, %v243, 0.0
  %v571 = vadd.f32 %v569, %v570
  %v572 = vsel %vm559, %v244, 0.0
  %v573 = vadd.f32 %v571, %v572
  %v574 = vsel %vm557, %v245, 0.0
  %v575 = vadd.f32 %v573, %v574
  %v576 = vsel %vm559, %v246, 0.0
  %v577 = vadd.f32 %v575, %v576
  %v578 = vsel %vm557, %v247, 0.0
  %v579 = vadd.f32 %v577, %v578
  %v580 = vsel %vm559, %v248, 0.0
  %v581 = vadd.f32 %v579, %v580
  %v582 = vsel %vm557, %v249, 0.0
  %v583 = vadd.f32 %v581, %v582
  %v584 = vsel %vm559, %v250, 0.0
  %v585 = vadd.f32 %v583, %v584
  %v586 = vsel %vm557, %v251, 0.0
  %v587 = vadd.f32 %v585, %v586
  %v588 = vsel %vm559, %v252, 0.0
  %v589 = vadd.f32 %v587, %v588
  %v590 = vrot.slane %v589, 4
  %v591 = vadd.f32 %v589, %v590
  %v592 = vrot.slane %v591, 2
  %v593 = vadd.f32 %v591, %v592
  %v594 = vrot.slane %v593, 1
  %v595 = vadd.f32 %v593, %v594
  %v596 = vsel %vm557, %v253, 0.0
  %v597 = vsel %vm559, %v254, 0.0
  %v598 = vadd.f32 %v596, %v597
  %v599 = vsel %vm557, %v255, 0.0
  %v600 = vadd.f32 %v598, %v599
  %v601 = vsel %vm559, %v256, 0.0
  %v602 = vadd.f32 %v600, %v601
  %v603 = vsel %vm557, %v257, 0.0
  %v604 = vadd.f32 %v602, %v603
  %v605 = vsel %vm559, %v258, 0.0
  %v606 = vadd.f32 %v604, %v605
  %v607 = vsel %vm557, %v259, 0.0
  %v608 = vadd.f32 %v606, %v607
  %v609 = vsel %vm559, %v260, 0.0
  %v610 = vadd.f32 %v608, %v609
  %v611 = vsel %vm557, %v261, 0.0
  %v612 = vadd.f32 %v610, %v611
  %v613 = vsel %vm559, %v262, 0.0
  %v614 = vadd.f32 %v612, %v613
  %v615 = vsel %vm557, %v263, 0.0
  %v616 = vadd.f32 %v614, %v615
  %v617 = vsel %vm559, %v264, 0.0
  %v618 = vadd.f32 %v616, %v617
  %v619 = vsel %vm557, %v265, 0.0
  %v620 = vadd.f32 %v618, %v619
  %v621 = vsel %vm559, %v266, 0.0
  %v622 = vadd.f32 %v620, %v621
  %v623 = vsel %vm557, %v267, 0.0
  %v624 = vadd.f32 %v622, %v623
  %v625 = vsel %vm559, %v268, 0.0
  %v626 = vadd.f32 %v624, %v625
  %v627 = vrot.slane %v626, 4
  %v628 = vadd.f32 %v626, %v627
  %v629 = vrot.slane %v628, 2
  %v630 = vadd.f32 %v628, %v629
  %v631 = vrot.slane %v630, 1
  %v632 = vadd.f32 %v630, %v631
  %v633 = vsel %vm559, %v237, 0.0
  %v634 = vsel %vm559, %v239, 0.0
  %v635 = vadd.f32 %v633, %v634
  %v636 = vsel %vm559, %v241, 0.0
  %v637 = vadd.f32 %v635, %v636
  %v638 = vsel %vm559, %v243, 0.0
  %v639 = vadd.f32 %v637, %v638
  %v640 = vsel %vm559, %v245, 0.0
  %v641 = vadd.f32 %v639, %v640
  %v642 = vsel %vm559, %v247, 0.0
  %v643 = vadd.f32 %v641, %v642
  %v644 = vsel %vm559, %v249, 0.0
  %v645 = vadd.f32 %v643, %v644
  %v646 = vsel %vm559, %v251, 0.0
  %v647 = vadd.f32 %v645, %v646
  %v648 = vrot.slane %v647, 4
  %v649 = vadd.f32 %v647, %v648
  %v650 = vrot.slane %v649, 2
  %v651 = vadd.f32 %v649, %v650
  %v652 = vrot.slane %v651, 1
  %v653 = vadd.f32 %v651, %v652
  %v654 = vsel %vm559, %v253, 0.0
  %v655 = vsel %vm559, %v255, 0.0
  %v656 = vadd.f32 %v654, %v655
  %v657 = vsel %vm559, %v257, 0.0
  %v658 = vadd.f32 %v656, %v657
  %v659 = vsel %vm559, %v259, 0.0
  %v660 = vadd.f32 %v658, %v659
  %v661 = vsel %vm559, %v261, 0.0
  %v662 = vadd.f32 %v660, %v661
  %v663 = vsel %vm559, %v263, 0.0
  %v664 = vadd.f32 %v662, %v663
  %v665 = vsel %vm559, %v265, 0.0
  %v666 = vadd.f32 %v664, %v665
  %v667 = vsel %vm559, %v267, 0.0
  %v668 = vadd.f32 %v666, %v667
  %v669 = vrot.slane %v668, 4
  %v670 = vadd.f32 %v668, %v669
  %v671 = vrot.slane %v670, 2
  %v672 = vadd.f32 %v670, %v671
  %v673 = vrot.slane %v672, 1
  %v674 = vadd.f32 %v672, %v673
  %v675 = vadd.f32 %v560, %v564
  %v676 = vadd.f32 %v675, %v568
  %v677 = vadd.f32 %v676, %v572
  %v678 = vadd.f32 %v677, %v576
  %v679 = vadd.f32 %v678, %v580
  %v680 = vadd.f32 %v679, %v584
  %v681 = vadd.f32 %v680, %v588
  %v682 = vrot.slane %v681, 4
  %v683 = vadd.f32 %v681, %v682
  %v684 = vrot.slane %v683, 2
  %v685 = vadd.f32 %v683, %v684
  %v686 = vrot.slane %v685, 1
  %v687 = vadd.f32 %v685, %v686
  %v688 = vadd.f32 %v597, %v601
  %v689 = vadd.f32 %v688, %v605
  %v690 = vadd.f32 %v689, %v609
  %v691 = vadd.f32 %v690, %v613
  %v692 = vadd.f32 %v691, %v617
  %v693 = vadd.f32 %v692, %v621
  %v694 = vadd.f32 %v693, %v625
  %v695 = vrot.slane %v694, 4
  %v696 = vadd.f32 %v694, %v695
  %v697 = vrot.slane %v696, 2
  %v698 = vadd.f32 %v696, %v697
  %v699 = vrot.slane %v698, 1
  %v700 = vadd.f32 %v698, %v699
  %v701 = vsel %vm557, %v333, 0.0
  %v702 = vsel %vm559, %v334, 0.0
  %v703 = vadd.f32 %v701, %v702
  %v704 = vsel %vm557, %v335, 0.0
  %v705 = vadd.f32 %v703, %v704
  %v706 = vsel %vm559, %v336, 0.0
  %v707 = vadd.f32 %v705, %v706
  %v708 = vsel %vm557, %v337, 0.0
  %v709 = vadd.f32 %v707, %v708
  %v710 = vsel %vm559, %v338, 0.0
  %v711 = vadd.f32 %v709, %v710
  %v712 = vsel %vm557, %v339, 0.0
  %v713 = vadd.f32 %v711, %v712
  %v714 = vsel %vm559, %v340, 0.0
  %v715 = vadd.f32 %v713, %v714
  %v716 = vsel %vm557, %v341, 0.0
  %v717 = vadd.f32 %v715, %v716
  %v718 = vsel %vm559, %v342, 0.0
  %v719 = vadd.f32 %v717, %v718
  %v720 = vsel %vm557, %v343, 0.0
  %v721 = vadd.f32 %v719, %v720
  %v722 = vsel %vm559, %v344, 0.0
  %v723 = vadd.f32 %v721, %v722
  %v724 = vsel %vm557, %v345, 0.0
  %v725 = vadd.f32 %v723, %v724
  %v726 = vsel %vm559, %v346, 0.0
  %v727 = vadd.f32 %v725, %v726
  %v728 = vsel %vm557, %v347, 0.0
  %v729 = vadd.f32 %v727, %v728
  %v730 = vsel %vm559, %v348, 0.0
  %v731 = vadd.f32 %v729, %v730
  %v732 = vrot.slane %v731, 4
  %v733 = vadd.f32 %v731, %v732
  %v734 = vrot.slane %v733, 2
  %v735 = vadd.f32 %v733, %v734
  %v736 = vrot.slane %v735, 1
  %v737 = vadd.f32 %v735, %v736
  %v738 = vsel %vm557, %v349, 0.0
  %v739 = vsel %vm559, %v350, 0.0
  %v740 = vadd.f32 %v738, %v739
  %v741 = vsel %vm557, %v351, 0.0
  %v742 = vadd.f32 %v740, %v741
  %v743 = vsel %vm559, %v352, 0.0
  %v744 = vadd.f32 %v742, %v743
  %v745 = vsel %vm557, %v353, 0.0
  %v746 = vadd.f32 %v744, %v745
  %v747 = vsel %vm559, %v354, 0.0
  %v748 = vadd.f32 %v746, %v747
  %v749 = vsel %vm557, %v355, 0.0
  %v750 = vadd.f32 %v748, %v749
  %v751 = vsel %vm559, %v356, 0.0
  %v752 = vadd.f32 %v750, %v751
  %v753 = vsel %vm557, %v357, 0.0
  %v754 = vadd.f32 %v752, %v753
  %v755 = vsel %vm559, %v358, 0.0
  %v756 = vadd.f32 %v754, %v755
  %v757 = vsel %vm557, %v359, 0.0
  %v758 = vadd.f32 %v756, %v757
  %v759 = vsel %vm559, %v360, 0.0
  %v760 = vadd.f32 %v758, %v759
  %v761 = vsel %vm557, %v361, 0.0
  %v762 = vadd.f32 %v760, %v761
  %v763 = vsel %vm559, %v362, 0.0
  %v764 = vadd.f32 %v762, %v763
  %v765 = vsel %vm557, %v363, 0.0
  %v766 = vadd.f32 %v764, %v765
  %v767 = vsel %vm559, %v364, 0.0
  %v768 = vadd.f32 %v766, %v767
  %v769 = vrot.slane %v768, 4
  %v770 = vadd.f32 %v768, %v769
  %v771 = vrot.slane %v770, 2
  %v772 = vadd.f32 %v770, %v771
  %v773 = vrot.slane %v772, 1
  %v774 = vadd.f32 %v772, %v773
  %v775 = vsel %vm559, %v333, 0.0
  %v776 = vsel %vm559, %v335, 0.0
  %v777 = vadd.f32 %v775, %v776
  %v778 = vsel %vm559, %v337, 0.0
  %v779 = vadd.f32 %v777, %v778
  %v780 = vsel %vm559, %v339, 0.0
  %v781 = vadd.f32 %v779, %v780
  %v782 = vsel %vm559, %v341, 0.0
  %v783 = vadd.f32 %v781, %v782
  %v784 = vsel %vm559, %v343, 0.0
  %v785 = vadd.f32 %v783, %v784
  %v786 = vsel %vm559, %v345, 0.0
  %v787 = vadd.f32 %v785, %v786
  %v788 = vsel %vm559, %v347, 0.0
  %v789 = vadd.f32 %v787, %v788
  %v790 = vrot.slane %v789, 4
  %v791 = vadd.f32 %v789, %v790
  %v792 = vrot.slane %v791, 2
  %v793 = vadd.f32 %v791, %v792
  %v794 = vrot.slane %v793, 1
  %v795 = vadd.f32 %v793, %v794
  %v796 = vsel %vm559, %v349, 0.0
  %v797 = vsel %vm559, %v351, 0.0
  %v798 = vadd.f32 %v796, %v797
  %v799 = vsel %vm559, %v353, 0.0
  %v800 = vadd.f32 %v798, %v799
  %v801 = vsel %vm559, %v355, 0.0
  %v802 = vadd.f32 %v800, %v801
  %v803 = vsel %vm559, %v357, 0.0
  %v804 = vadd.f32 %v802, %v803
  %v805 = vsel %vm559, %v359, 0.0
  %v806 = vadd.f32 %v804, %v805
  %v807 = vsel %vm559, %v361, 0.0
  %v808 = vadd.f32 %v806, %v807
  %v809 = vsel %vm559, %v363, 0.0
  %v810 = vadd.f32 %v808, %v809
  %v811 = vrot.slane %v810, 4
  %v812 = vadd.f32 %v810, %v811
  %v813 = vrot.slane %v812, 2
  %v814 = vadd.f32 %v812, %v813
  %v815 = vrot.slane %v814, 1
  %v816 = vadd.f32 %v814, %v815
  %v817 = vadd.f32 %v702, %v706
  %v818 = vadd.f32 %v817, %v710
  %v819 = vadd.f32 %v818, %v714
  %v820 = vadd.f32 %v819, %v718
  %v821 = vadd.f32 %v820, %v722
  %v822 = vadd.f32 %v821, %v726
  %v823 = vadd.f32 %v822, %v730
  %v824 = vrot.slane %v823, 4
  %v825 = vadd.f32 %v823, %v824
  %v826 = vrot.slane %v825, 2
  %v827 = vadd.f32 %v825, %v826
  %v828 = vrot.slane %v827, 1
  %v829 = vadd.f32 %v827, %v828
  %v830 = vadd.f32 %v739, %v743
  %v831 = vadd.f32 %v830, %v747
  %v832 = vadd.f32 %v831, %v751
  %v833 = vadd.f32 %v832, %v755
  %v834 = vadd.f32 %v833, %v759
  %v835 = vadd.f32 %v834, %v763
  %v836 = vadd.f32 %v835, %v767
  %v837 = vrot.slane %v836, 4
  %v838 = vadd.f32 %v836, %v837
  %v839 = vrot.slane %v838, 2
  %v840 = vadd.f32 %v838, %v839
  %v841 = vrot.slane %v840, 1
  %v842 = vadd.f32 %v840, %v841
  %v843 = vsel %vm557, %v429, 0.0
  %v844 = vsel %vm559, %v430, 0.0
  %v845 = vadd.f32 %v843, %v844
  %v846 = vsel %vm557, %v431, 0.0
  %v847 = vadd.f32 %v845, %v846
  %v848 = vsel %vm559, %v432, 0.0
  %v849 = vadd.f32 %v847, %v848
  %v850 = vsel %vm557, %v433, 0.0
  %v851 = vadd.f32 %v849, %v850
  %v852 = vsel %vm559, %v434, 0.0
  %v853 = vadd.f32 %v851, %v852
  %v854 = vsel %vm557, %v435, 0.0
  %v855 = vadd.f32 %v853, %v854
  %v856 = vsel %vm559, %v436, 0.0
  %v857 = vadd.f32 %v855, %v856
  %v858 = vsel %vm557, %v437, 0.0
  %v859 = vadd.f32 %v857, %v858
  %v860 = vsel %vm559, %v438, 0.0
  %v861 = vadd.f32 %v859, %v860
  %v862 = vsel %vm557, %v439, 0.0
  %v863 = vadd.f32 %v861, %v862
  %v864 = vsel %vm559, %v440, 0.0
  %v865 = vadd.f32 %v863, %v864
  %v866 = vsel %vm557, %v441, 0.0
  %v867 = vadd.f32 %v865, %v866
  %v868 = vsel %vm559, %v442, 0.0
  %v869 = vadd.f32 %v867, %v868
  %v870 = vsel %vm557, %v443, 0.0
  %v871 = vadd.f32 %v869, %v870
  %v872 = vsel %vm559, %v444, 0.0
  %v873 = vadd.f32 %v871, %v872
  %v874 = vrot.slane %v873, 4
  %v875 = vadd.f32 %v873, %v874
  %v876 = vrot.slane %v875, 2
  %v877 = vadd.f32 %v875, %v876
  %v878 = vrot.slane %v877, 1
  %v879 = vadd.f32 %v877, %v878
  %v880 = vsel %vm557, %v445, 0.0
  %v881 = vsel %vm559, %v446, 0.0
  %v882 = vadd.f32 %v880, %v881
  %v883 = vsel %vm557, %v447, 0.0
  %v884 = vadd.f32 %v882, %v883
  %v885 = vsel %vm559, %v448, 0.0
  %v886 = vadd.f32 %v884, %v885
  %v887 = vsel %vm557, %v449, 0.0
  %v888 = vadd.f32 %v886, %v887
  %v889 = vsel %vm559, %v450, 0.0
  %v890 = vadd.f32 %v888, %v889
  %v891 = vsel %vm557, %v451, 0.0
  %v892 = vadd.f32 %v890, %v891
  %v893 = vsel %vm559, %v452, 0.0
  %v894 = vadd.f32 %v892, %v893
  %v895 = vsel %vm557, %v453, 0.0
  %v896 = vadd.f32 %v894, %v895
  %v897 = vsel %vm559, %v454, 0.0
  %v898 = vadd.f32 %v896, %v897
  %v899 = vsel %vm557, %v455, 0.0
  %v900 = vadd.f32 %v898, %v899
  %v901 = vsel %vm559, %v456, 0.0
  %v902 = vadd.f32 %v900, %v901
  %v903 = vsel %vm557, %v457, 0.0
  %v904 = vadd.f32 %v902, %v903
  %v905 = vsel %vm559, %v458, 0.0
  %v906 = vadd.f32 %v904, %v905
  %v907 = vsel %vm557, %v459, 0.0
  %v908 = vadd.f32 %v906, %v907
  %v909 = vsel %vm559, %v460, 0.0
  %v910 = vadd.f32 %v908, %v909
  %v911 = vrot.slane %v910, 4
  %v912 = vadd.f32 %v910, %v911
  %v913 = vrot.slane %v912, 2
  %v914 = vadd.f32 %v912, %v913
  %v915 = vrot.slane %v914, 1
  %v916 = vadd.f32 %v914, %v915
  %v917 = vsel %vm559, %v429, 0.0
  %v918 = vsel %vm559, %v431, 0.0
  %v919 = vadd.f32 %v917, %v918
  %v920 = vsel %vm559, %v433, 0.0
  %v921 = vadd.f32 %v919, %v920
  %v922 = vsel %vm559, %v435, 0.0
  %v923 = vadd.f32 %v921, %v922
  %v924 = vsel %vm559, %v437, 0.0
  %v925 = vadd.f32 %v923, %v924
  %v926 = vsel %vm559, %v439, 0.0
  %v927 = vadd.f32 %v925, %v926
  %v928 = vsel %vm559, %v441, 0.0
  %v929 = vadd.f32 %v927, %v928
  %v930 = vsel %vm559, %v443, 0.0
  %v931 = vadd.f32 %v929, %v930
  %v932 = vrot.slane %v931, 4
  %v933 = vadd.f32 %v931, %v932
  %v934 = vrot.slane %v933, 2
  %v935 = vadd.f32 %v933, %v934
  %v936 = vrot.slane %v935, 1
  %v937 = vadd.f32 %v935, %v936
  %v938 = vsel %vm559, %v445, 0.0
  %v939 = vsel %vm559, %v447, 0.0
  %v940 = vadd.f32 %v938, %v939
  %v941 = vsel %vm559, %v449, 0.0
  %v942 = vadd.f32 %v940, %v941
  %v943 = vsel %vm559, %v451, 0.0
  %v944 = vadd.f32 %v942, %v943
  %v945 = vsel %vm559, %v453, 0.0
  %v946 = vadd.f32 %v944, %v945
  %v947 = vsel %vm559, %v455, 0.0
  %v948 = vadd.f32 %v946, %v947
  %v949 = vsel %vm559, %v457, 0.0
  %v950 = vadd.f32 %v948, %v949
  %v951 = vsel %vm559, %v459, 0.0
  %v952 = vadd.f32 %v950, %v951
  %v953 = vrot.slane %v952, 4
  %v954 = vadd.f32 %v952, %v953
  %v955 = vrot.slane %v954, 2
  %v956 = vadd.f32 %v954, %v955
  %v957 = vrot.slane %v956, 1
  %v958 = vadd.f32 %v956, %v957
  %v959 = vadd.f32 %v844, %v848
  %v960 = vadd.f32 %v959, %v852
  %v961 = vadd.f32 %v960, %v856
  %v962 = vadd.f32 %v961, %v860
  %v963 = vadd.f32 %v962, %v864
  %v964 = vadd.f32 %v963, %v868
  %v965 = vadd.f32 %v964, %v872
  %v966 = vrot.slane %v965, 4
  %v967 = vadd.f32 %v965, %v966
  %v968 = vrot.slane %v967, 2
  %v969 = vadd.f32 %v967, %v968
  %v970 = vrot.slane %v969, 1
  %v971 = vadd.f32 %v969, %v970
  %v972 = vadd.f32 %v881, %v885
  %v973 = vadd.f32 %v972, %v889
  %v974 = vadd.f32 %v973, %v893
  %v975 = vadd.f32 %v974, %v897
  %v976 = vadd.f32 %v975, %v901
  %v977 = vadd.f32 %v976, %v905
  %v978 = vadd.f32 %v977, %v909
  %v979 = vrot.slane %v978, 4
  %v980 = vadd.f32 %v978, %v979
  %v981 = vrot.slane %v980, 2
  %v982 = vadd.f32 %v980, %v981
  %v983 = vrot.slane %v982, 1
  %v984 = vadd.f32 %v982, %v983
  %v985 = vsel %vm557, %v525, 0.0
  %v986 = vsel %vm559, %v526, 0.0
  %v987 = vadd.f32 %v985, %v986
  %v988 = vsel %vm557, %v527, 0.0
  %v989 = vadd.f32 %v987, %v988
  %v990 = vsel %vm559, %v528, 0.0
  %v991 = vadd.f32 %v989, %v990
  %v992 = vsel %vm557, %v529, 0.0
  %v993 = vadd.f32 %v991, %v992
  %v994 = vsel %vm559, %v530, 0.0
  %v995 = vadd.f32 %v993, %v994
  %v996 = vsel %vm557, %v531, 0.0
  %v997 = vadd.f32 %v995, %v996
  %v998 = vsel %vm559, %v532, 0.0
  %v999 = vadd.f32 %v997, %v998
  %v1000 = vsel %vm557, %v533, 0.0
  %v1001 = vadd.f32 %v999, %v1000
  %v1002 = vsel %vm559, %v534, 0.0
  %v1003 = vadd.f32 %v1001, %v1002
  %v1004 = vsel %vm557, %v535, 0.0
  %v1005 = vadd.f32 %v1003, %v1004
  %v1006 = vsel %vm559, %v536, 0.0
  %v1007 = vadd.f32 %v1005, %v1006
  %v1008 = vsel %vm557, %v537, 0.0
  %v1009 = vadd.f32 %v1007, %v1008
  %v1010 = vsel %vm559, %v538, 0.0
  %v1011 = vadd.f32 %v1009, %v1010
  %v1012 = vsel %vm557, %v539, 0.0
  %v1013 = vadd.f32 %v1011, %v1012
  %v1014 = vsel %vm559, %v540, 0.0
  %v1015 = vadd.f32 %v1013, %v1014
  %v1016 = vrot.slane %v1015, 4
  %v1017 = vadd.f32 %v1015, %v1016
  %v1018 = vrot.slane %v1017, 2
  %v1019 = vadd.f32 %v1017, %v1018
  %v1020 = vrot.slane %v1019, 1
  %v1021 = vadd.f32 %v1019, %v1020
  %v1022 = vsel %vm557, %v541, 0.0
  %v1023 = vsel %vm559, %v542, 0.0
  %v1024 = vadd.f32 %v1022, %v1023
  %v1025 = vsel %vm557, %v543, 0.0
  %v1026 = vadd.f32 %v1024, %v1025
  %v1027 = vsel %vm559, %v544, 0.0
  %v1028 = vadd.f32 %v1026, %v1027
  %v1029 = vsel %vm557, %v545, 0.0
  %v1030 = vadd.f32 %v1028, %v1029
  %v1031 = vsel %vm559, %v546, 0.0
  %v1032 = vadd.f32 %v1030, %v1031
  %v1033 = vsel %vm557, %v547, 0.0
  %v1034 = vadd.f32 %v1032, %v1033
  %v1035 = vsel %vm559, %v548, 0.0
  %v1036 = vadd.f32 %v1034, %v1035
  %v1037 = vsel %vm557, %v549, 0.0
  %v1038 = vadd.f32 %v1036, %v1037
  %v1039 = vsel %vm559, %v550, 0.0
  %v1040 = vadd.f32 %v1038, %v1039
  %v1041 = vsel %vm557, %v551, 0.0
  %v1042 = vadd.f32 %v1040, %v1041
  %v1043 = vsel %vm559, %v552, 0.0
  %v1044 = vadd.f32 %v1042, %v1043
  %v1045 = vsel %vm557, %v553, 0.0
  %v1046 = vadd.f32 %v1044, %v1045
  %v1047 = vsel %vm559, %v554, 0.0
  %v1048 = vadd.f32 %v1046, %v1047
  %v1049 = vsel %vm557, %v555, 0.0
  %v1050 = vadd.f32 %v1048, %v1049
  %v1051 = vsel %vm559, %v556, 0.0
  %v1052 = vadd.f32 %v1050, %v1051
  %v1053 = vrot.slane %v1052, 4
  %v1054 = vadd.f32 %v1052, %v1053
  %v1055 = vrot.slane %v1054, 2
  %v1056 = vadd.f32 %v1054, %v1055
  %v1057 = vrot.slane %v1056, 1
  %v1058 = vadd.f32 %v1056, %v1057
  %v1059 = vsel %vm559, %v525, 0.0
  %v1060 = vsel %vm559, %v527, 0.0
  %v1061 = vadd.f32 %v1059, %v1060
  %v1062 = vsel %vm559, %v529, 0.0
  %v1063 = vadd.f32 %v1061, %v1062
  %v1064 = vsel %vm559, %v531, 0.0
  %v1065 = vadd.f32 %v1063, %v1064
  %v1066 = vsel %vm559, %v533, 0.0
  %v1067 = vadd.f32 %v1065, %v1066
  %v1068 = vsel %vm559, %v535, 0.0
  %v1069 = vadd.f32 %v1067, %v1068
  %v1070 = vsel %vm559, %v537, 0.0
  %v1071 = vadd.f32 %v1069, %v1070
  %v1072 = vsel %vm559, %v539, 0.0
  %v1073 = vadd.f32 %v1071, %v1072
  %v1074 = vrot.slane %v1073, 4
  %v1075 = vadd.f32 %v1073, %v1074
  %v1076 = vrot.slane %v1075, 2
  %v1077 = vadd.f32 %v1075, %v1076
  %v1078 = vrot.slane %v1077, 1
  %v1079 = vadd.f32 %v1077, %v1078
  %v1080 = vsel %vm559, %v541, 0.0
  %v1081 = vsel %vm559, %v543, 0.0
  %v1082 = vadd.f32 %v1080, %v1081
  %v1083 = vsel %vm559, %v545, 0.0
  %v1084 = vadd.f32 %v1082, %v1083
  %v1085 = vsel %vm559, %v547, 0.0
  %v1086 = vadd.f32 %v1084, %v1085
  %v1087 = vsel %vm559, %v549, 0.0
  %v1088 = vadd.f32 %v1086, %v1087
  %v1089 = vsel %vm559, %v551, 0.0
  %v1090 = vadd.f32 %v1088, %v1089
  %v1091 = vsel %vm559, %v553, 0.0
  %v1092 = vadd.f32 %v1090, %v1091
  %v1093 = vsel %vm559, %v555, 0.0
  %v1094 = vadd.f32 %v1092, %v1093
  %v1095 = vrot.slane %v1094, 4
  %v1096 = vadd.f32 %v1094, %v1095
  %v1097 = vrot.slane %v1096, 2
  %v1098 = vadd.f32 %v1096, %v1097
  %v1099 = vrot.slane %v1098, 1
  %v1100 = vadd.f32 %v1098, %v1099
  %v1101 = vadd.f32 %v986, %v990
  %v1102 = vadd.f32 %v1101, %v994
  %v1103 = vadd.f32 %v1102, %v998
  %v1104 = vadd.f32 %v1103, %v1002
  %v1105 = vadd.f32 %v1104, %v1006
  %v1106 = vadd.f32 %v1105, %v1010
  %v1107 = vadd.f32 %v1106, %v1014
  %v1108 = vrot.slane %v1107, 4
  %v1109 = vadd.f32 %v1107, %v1108
  %v1110 = vrot.slane %v1109, 2
  %v1111 = vadd.f32 %v1109, %v1110
  %v1112 = vrot.slane %v1111, 1
  %v1113 = vadd.f32 %v1111, %v1112
  %v1114 = vadd.f32 %v1023, %v1027
  %v1115 = vadd.f32 %v1114, %v1031
  %v1116 = vadd.f32 %v1115, %v1035
  %v1117 = vadd.f32 %v1116, %v1039
  %v1118 = vadd.f32 %v1117, %v1043
  %v1119 = vadd.f32 %v1118, %v1047
  %v1120 = vadd.f32 %v1119, %v1051
  %v1121 = vrot.slane %v1120, 4
  %v1122 = vadd.f32 %v1120, %v1121
  %v1123 = vrot.slane %v1122, 2
  %v1124 = vadd.f32 %v1122, %v1123
  %v1125 = vrot.slane %v1124, 1
  %v1126 = vadd.f32 %v1124, %v1125
  %v1127 = vadd.f32 %v595, %v737
  %v1128 = vadd.f32 %v632, %v774
  %v1129 = vmul.f32 %v1127, 2.0
  %v1130 = vmul.f32 %v1128, 2.0
  %v1131 = vadd.f32 %v879, %v1021
  %v1132 = vadd.f32 %v916, %v1058
  %v1133 = vmul.f32 %v1131, 2.0
  %v1134 = vmul.f32 %v1132, 2.0
  %v1135 = vsub.f32 %v1129, %v653
  %v1136 = vsub.f32 %v1130, %v674
  %v1137 = vsub.f32 %v1135, %v687
  %v1138 = vsub.f32 %v1136, %v700
  %v1139 = vmul.f32 %v829, 2.0
  %v1140 = vmul.f32 %v842, 2.0
  %v1141 = vsub.f32 %v1137, %v1139
  %v1142 = vsub.f32 %v1138, %v1140
  %v1143 = vsub.f32 %v1133, %v937
  %v1144 = vsub.f32 %v1134, %v958
  %v1145 = vsub.f32 %v1143, %v971
  %v1146 = vsub.f32 %v1144, %v984
  %v1147 = vmul.f32 %v1113, 2.0
  %v1148 = vmul.f32 %v1126, 2.0
  %v1149 = vsub.f32 %v1145, %v1147
  %v1150 = vsub.f32 %v1146, %v1148
  %v1151 = vmul.f32 %v653, 2.0
  %v1152 = vmul.f32 %v674, 2.0
  %v1153 = vsub.f32 %v1129, %v1151
  %v1154 = vsub.f32 %v1130, %v1152
  %v1155 = vsub.f32 %v1153, %v795
  %v1156 = vsub.f32 %v1154, %v816
  %v1157 = vsub.f32 %v1155, %v829
  %v1158 = vsub.f32 %v1156, %v842
  %v1159 = vmul.f32 %v937, 2.0
  %v1160 = vmul.f32 %v958, 2.0
  %v1161 = vsub.f32 %v1133, %v1159
  %v1162 = vsub.f32 %v1134, %v1160
  %v1163 = vsub.f32 %v1161, %v1079
  %v1164 = vsub.f32 %v1162, %v1100
  %v1165 = vsub.f32 %v1163, %v1113
  %v1166 = vsub.f32 %v1164, %v1126
  %vm1169 = vcmask 1041409
  %v1170 = vsel %vm1169, %v1142, %v1141
  %v1174 = vsel %vm1169, %v1150, %v1149
  %1175 = vrot.lane.b32.xlu0 %v1174, 4
  %v1176 = vpop.permute.xlu0 %1175
  %v1180 = vsel %vm1169, %v1158, %v1157
  %1181 = vrot.lane.b32.xlu0 %v1180, 8
  %v1182 = vpop.permute.xlu0 %1181
  %v1186 = vsel %vm1169, %v1166, %v1165
  %1187 = vrot.lane.b32.xlu0 %v1186, 12
  %v1188 = vpop.permute.xlu0 %1187
  %v1190 = vsel %vm557, %v1170, %v1176
  %vm1191 = vcmask 64512
  %v1192 = vsel %vm1191, %v1190, %v1182
  %vm1193 = vcmask 97280
  %v1194 = vsel %vm1193, %v1192, %v1188
  %v1195 = vmul.f32 %v1194, 0.0009765625
  %v1196 = vld [vmem:[%s4] sm:$0xff]
  %v1197 = vld [vmem:[%s4 + $0x8] sm:$0xff]
  %v1198 = vld [vmem:[%s5] sm:$0x1]
  %v1200 = vlaneseq
  %v1201 = vshrl.u32 %v1200, 7
  %v1202 = vsub.s32 0, %v1201
  %v1203 = vrot.slane %v1198, %v1202
  %vm1205 = vcmask 130048
  %v1207 = vsel %vm1205, %v1195, 0
  %1209 = vmatprep.subr.mxu0 0.0
  %1210 = vmatpush1.msra.mxu0 0.0
  %1211 = vmatprep.subr.mxu0 0.0
  %1212 = vmatpush1.msra.mxu0 0.0
  %1213 = vmatprep.subr.mxu0 0.0
  %1214 = vmatpush1.msra.mxu0 0.0
  %1215 = vmatprep.subr.mxu0 0.0
  %1216 = vmatpush1.msra.mxu0 0.0
  %1217 = vmatprep.subr.mxu0 0.0
  %1218 = vmatpush1.msra.mxu0 0.0
  %1219 = vmatprep.subr.mxu0 0.0
  %1220 = vmatpush1.msra.mxu0 0.0
  %1221 = vmatprep.subr.mxu0 0.0
  %1222 = vmatpush1.msra.mxu0 0.0
  %1223 = vmatprep.subr.mxu0 0.0
  %1224 = vmatpush1.msra.mxu0 0.0
  %1225 = vmatprep.subr.mxu0 0.0
  %1226 = vmatpush1.msra.mxu0 0.0
  %1227 = vmatprep.subr.mxu0 0.0
  %1228 = vmatpush1.msra.mxu0 0.0
  %1229 = vmatprep.subr.mxu0 0.0
  %1230 = vmatpush1.msra.mxu0 0.0
  %1231 = vmatprep.subr.mxu0 0.0
  %1232 = vmatpush1.msra.mxu0 0.0
  %1233 = vmatprep.subr.mxu0 0.0
  %1234 = vmatpush1.msra.mxu0 0.0
  %1235 = vmatprep.subr.mxu0 0.0
  %1236 = vmatpush1.msra.mxu0 0.0
  %1237 = vmatprep.subr.mxu0 0.0
  %1238 = vmatpush1.msra.mxu0 %v1197
  %1239 = vmatprep.subr.mxu0 0.0
  %1240 = vmatpush1.msra.mxu0 %v1196
  %1241 = vmatprep.subr.mxu0 0.0
  %1242 = vmatpush2.msra.mxu0 0.0
  %1243 = vmatprep.subr.mxu0 0.0
  %1244 = vmatpush2.msra.mxu0 0.0
  %1245 = vmatprep.subr.mxu0 0.0
  %1246 = vmatpush2.msra.mxu0 0.0
  %1247 = vmatprep.subr.mxu0 0.0
  %1248 = vmatpush2.msra.mxu0 0.0
  %1249 = vmatprep.subr.mxu0 0.0
  %1250 = vmatpush2.msra.mxu0 0.0
  %1251 = vmatprep.subr.mxu0 0.0
  %1252 = vmatpush2.msra.mxu0 0.0
  %1253 = vmatprep.subr.mxu0 0.0
  %1254 = vmatpush2.msra.mxu0 0.0
  %1255 = vmatprep.subr.mxu0 0.0
  %1256 = vmatpush2.msra.mxu0 0.0
  %1257 = vmatprep.subr.mxu0 0.0
  %1258 = vmatpush2.msra.mxu0 0.0
  %1259 = vmatprep.subr.mxu0 0.0
  %1260 = vmatpush2.msra.mxu0 0.0
  %1261 = vmatprep.subr.mxu0 0.0
  %1262 = vmatpush2.msra.mxu0 0.0
  %1263 = vmatprep.subr.mxu0 0.0
  %1264 = vmatpush2.msra.mxu0 0.0
  %1265 = vmatprep.subr.mxu0 0.0
  %1266 = vmatpush2.msra.mxu0 0.0
  %1267 = vmatprep.subr.mxu0 0.0
  %1268 = vmatpush2.msra.mxu0 0.0
  %1269 = vmatprep.subr.mxu0 0.0
  %1270 = vmatpush2.msra.mxu0 0.0
  %1271 = vmatprep.subr.mxu0 0.0
  %1272 = vmatpush2.msra.mxu0 0.0
  %1273 = vmatprep.mubr.f32.mxu0 0.0
  %1274 = vmatmul.mubr.f32.gmra.mxu0 %v1207
  %v1275 = vpop.f32.mrf.mxu0
  %v1276 = vadd.f32 %v1203, %v1275
  %v1277 = vpop.f32.mrf.mxu0
  %1278 = vdwg.mxu0
  %v1279 = vmax.f32 %v1276, 0.0
  %v1280 = vld [vmem:[%s6] sm:$0xf]
  %v1281 = vld [vmem:[%s7] sm:$0x1]
  %v1283 = vlaneseq
  %v1284 = vshrl.u32 %v1283, 7
  %v1285 = vsub.s32 0, %v1284
  %v1286 = vrot.slane %v1281, %v1285
  %v1289 = vsel %vm557, %v1279, 0
  %vm1291 = vcmask 1043456
  %v1293 = vsel %vm1291, %v1280, 0
  %1295 = vmatprep.subr.mxu0 0.0
  %1296 = vmatpush1.msra.mxu0 0.0
  %1297 = vmatprep.subr.mxu0 0.0
  %1298 = vmatpush1.msra.mxu0 0.0
  %1299 = vmatprep.subr.mxu0 0.0
  %1300 = vmatpush1.msra.mxu0 0.0
  %1301 = vmatprep.subr.mxu0 0.0
  %1302 = vmatpush1.msra.mxu0 0.0
  %1303 = vmatprep.subr.mxu0 0.0
  %1304 = vmatpush1.msra.mxu0 0.0
  %1305 = vmatprep.subr.mxu0 0.0
  %1306 = vmatpush1.msra.mxu0 0.0
  %1307 = vmatprep.subr.mxu0 0.0
  %1308 = vmatpush1.msra.mxu0 0.0
  %1309 = vmatprep.subr.mxu0 0.0
  %1310 = vmatpush1.msra.mxu0 0.0
  %1311 = vmatprep.subr.mxu0 0.0
  %1312 = vmatpush1.msra.mxu0 0.0
  %1313 = vmatprep.subr.mxu0 0.0
  %1314 = vmatpush1.msra.mxu0 0.0
  %1315 = vmatprep.subr.mxu0 0.0
  %1316 = vmatpush1.msra.mxu0 0.0
  %1317 = vmatprep.subr.mxu0 0.0
  %1318 = vmatpush1.msra.mxu0 0.0
  %1319 = vmatprep.subr.mxu0 0.0
  %1320 = vmatpush1.msra.mxu0 0.0
  %1321 = vmatprep.subr.mxu0 0.0
  %1322 = vmatpush1.msra.mxu0 0.0
  %1323 = vmatprep.subr.mxu0 0.0
  %1324 = vmatpush1.msra.mxu0 0.0
  %1325 = vmatprep.subr.mxu0 0.0
  %1326 = vmatpush1.msra.mxu0 %v1293
  %1327 = vmatprep.subr.mxu0 0.0
  %1328 = vmatpush2.msra.mxu0 0.0
  %1329 = vmatprep.subr.mxu0 0.0
  %1330 = vmatpush2.msra.mxu0 0.0
  %1331 = vmatprep.subr.mxu0 0.0
  %1332 = vmatpush2.msra.mxu0 0.0
  %1333 = vmatprep.subr.mxu0 0.0
  %1334 = vmatpush2.msra.mxu0 0.0
  %1335 = vmatprep.subr.mxu0 0.0
  %1336 = vmatpush2.msra.mxu0 0.0
  %1337 = vmatprep.subr.mxu0 0.0
  %1338 = vmatpush2.msra.mxu0 0.0
  %1339 = vmatprep.subr.mxu0 0.0
  %1340 = vmatpush2.msra.mxu0 0.0
  %1341 = vmatprep.subr.mxu0 0.0
  %1342 = vmatpush2.msra.mxu0 0.0
  %1343 = vmatprep.subr.mxu0 0.0
  %1344 = vmatpush2.msra.mxu0 0.0
  %1345 = vmatprep.subr.mxu0 0.0
  %1346 = vmatpush2.msra.mxu0 0.0
  %1347 = vmatprep.subr.mxu0 0.0
  %1348 = vmatpush2.msra.mxu0 0.0
  %1349 = vmatprep.subr.mxu0 0.0
  %1350 = vmatpush2.msra.mxu0 0.0
  %1351 = vmatprep.subr.mxu0 0.0
  %1352 = vmatpush2.msra.mxu0 0.0
  %1353 = vmatprep.subr.mxu0 0.0
  %1354 = vmatpush2.msra.mxu0 0.0
  %1355 = vmatprep.subr.mxu0 0.0
  %1356 = vmatpush2.msra.mxu0 0.0
  %1357 = vmatprep.subr.mxu0 0.0
  %1358 = vmatpush2.msra.mxu0 0.0
  %1359 = vmatprep.mubr.f32.mxu0 0.0
  %1360 = vmatmul.mubr.f32.gmra.mxu0 %v1289
  %v1361 = vpop.f32.mrf.mxu0
  %v1362 = vadd.f32 %v1286, %v1361
  %v1363 = vpop.f32.mrf.mxu0
  %1364 = vdwg.mxu0
  %v1365 = vxor.u32 %v1362, 2147483648
  %v1366 = vmul.f32 %v1365, 1.442695
  %v1367 = vpow.pop %v1366
  %v1368 = vadd.f32 %v1367, 1.0
  %v1369 = vrcp.pop %v1368
  %v1370 = vmul.f32 1.0, %v1369
  %v1371 = vmul.f32 %v1370, 0.0625
  %v1374 = vunpack.c.l.s4 1966171168
  %v1375 = vunpack.c.0.s8 %v1374
  %v1376 = vlaneseq
  %v1377 = vshrl.u32 %v1376, 7
  %v1378 = vsub.s32 %v1375, %v1377
  %v1379 = vrot.slane %v1371, %v1378
  %v1380 = vcombine.high %v1379, %v1379
  %v1382 = vunpack.c.l.s4 1966171168
  %v1383 = vunpack.c.0.s8 %v1382
  %v1384 = vlaneseq
  %v1385 = vshrl.u32 %v1384, 7
  %v1386 = vsub.s32 %v1383, %v1385
  %v1387 = vrot.slane %v1379, %v1386
  %v1389 = vunpack.c.l.s4 1966171168
  %v1390 = vunpack.c.0.s8 %v1389
  %v1391 = vlaneseq
  %v1392 = vshrl.u32 %v1391, 7
  %v1393 = vsub.s32 %v1390, %v1392
  %v1394 = vrot.slane %v1380, %v1393
  %v1397 = vlaneseq
  %v1398 = vshrl.u32 %v1397, 7
  %v1399 = vsub.s32 0, %v1398
  %v1400 = vrot.slane %v1387, %v1399
  %v1401 = vlaneseq
  %v1402 = vshrl.u32 %v1401, 7
  %v1403 = vsub.s32 0, %v1402
  %v1404 = vrot.slane %v1394, %v1403
  %v1407 = vmul.f32 %v1400, %v237
  %v1408 = vmul.f32 %v1400, %v239
  %v1409 = vmul.f32 %v1400, %v241
  %v1410 = vmul.f32 %v1400, %v243
  %v1411 = vmul.f32 %v1400, %v245
  %v1412 = vmul.f32 %v1400, %v247
  %v1413 = vmul.f32 %v1400, %v249
  %v1414 = vmul.f32 %v1400, %v251
  %v1415 = vmul.f32 %v1404, %v253
  %v1416 = vmul.f32 %v1404, %v255
  %v1417 = vmul.f32 %v1404, %v257
  %v1418 = vmul.f32 %v1404, %v259
  %v1419 = vmul.f32 %v1404, %v261
  %v1420 = vmul.f32 %v1404, %v263
  %v1421 = vmul.f32 %v1404, %v265
  %v1422 = vmul.f32 %v1404, %v267
  %v1423 = vmul.f32 %v1387, 2.0
  %v1424 = vmul.f32 %v1394, 2.0
  %1425 = vrot.lane.b32.xlu0 %v1387, 120
  %v1426 = vpop.permute.xlu0 %1425
  %1427 = vrot.lane.b32.xlu0 %v1394, 120
  %v1428 = vpop.permute.xlu0 %1427
  %v1431 = vadd.f32 %v1423, %v1426
  %v1432 = vadd.f32 %v1424, %v1428
  %v1435 = vlaneseq
  %v1436 = vshrl.u32 %v1435, 7
  %v1437 = vsub.s32 0, %v1436
  %v1438 = vrot.slane %v1431, %v1437
  %v1439 = vlaneseq
  %v1440 = vshrl.u32 %v1439, 7
  %v1441 = vsub.s32 0, %v1440
  %v1442 = vrot.slane %v1432, %v1441
  %v1445 = vmul.f32 %v1438, %v333
  %v1446 = vmul.f32 %v1438, %v335
  %v1447 = vmul.f32 %v1438, %v337
  %v1448 = vmul.f32 %v1438, %v339
  %v1449 = vmul.f32 %v1438, %v341
  %v1450 = vmul.f32 %v1438, %v343
  %v1451 = vmul.f32 %v1438, %v345
  %v1452 = vmul.f32 %v1438, %v347
  %v1453 = vmul.f32 %v1442, %v349
  %v1454 = vmul.f32 %v1442, %v351
  %v1455 = vmul.f32 %v1442, %v353
  %v1456 = vmul.f32 %v1442, %v355
  %v1457 = vmul.f32 %v1442, %v357
  %v1458 = vmul.f32 %v1442, %v359
  %v1459 = vmul.f32 %v1442, %v361
  %v1460 = vmul.f32 %v1442, %v363
  %v1461 = vadd.f32 %v1407, %v1445
  %v1462 = vadd.f32 %v1408, %v1446
  %v1463 = vadd.f32 %v1409, %v1447
  %v1464 = vadd.f32 %v1410, %v1448
  %v1465 = vadd.f32 %v1411, %v1449
  %v1466 = vadd.f32 %v1412, %v1450
  %v1467 = vadd.f32 %v1413, %v1451
  %v1468 = vadd.f32 %v1414, %v1452
  %v1469 = vadd.f32 %v1415, %v1453
  %v1470 = vadd.f32 %v1416, %v1454
  %v1471 = vadd.f32 %v1417, %v1455
  %v1472 = vadd.f32 %v1418, %v1456
  %v1473 = vadd.f32 %v1419, %v1457
  %v1474 = vadd.f32 %v1420, %v1458
  %v1475 = vadd.f32 %v1421, %v1459
  %v1476 = vadd.f32 %v1422, %v1460
  %1493 = vrot.lane.b32.xlu0 %v429, 4
  %v1494 = vpop.permute.xlu0 %1493
  %1495 = vrot.lane.b32.xlu0 %v431, 4
  %v1496 = vpop.permute.xlu0 %1495
  %1497 = vrot.lane.b32.xlu0 %v433, 4
  %v1498 = vpop.permute.xlu0 %1497
  %1499 = vrot.lane.b32.xlu0 %v435, 4
  %v1500 = vpop.permute.xlu0 %1499
  %1501 = vrot.lane.b32.xlu0 %v437, 4
  %v1502 = vpop.permute.xlu0 %1501
  %1503 = vrot.lane.b32.xlu0 %v439, 4
  %v1504 = vpop.permute.xlu0 %1503
  %1505 = vrot.lane.b32.xlu0 %v441, 4
  %v1506 = vpop.permute.xlu0 %1505
  %1507 = vrot.lane.b32.xlu0 %v443, 4
  %v1508 = vpop.permute.xlu0 %1507
  %1509 = vrot.lane.b32.xlu0 %v445, 4
  %v1510 = vpop.permute.xlu0 %1509
  %1511 = vrot.lane.b32.xlu0 %v447, 4
  %v1512 = vpop.permute.xlu0 %1511
  %1513 = vrot.lane.b32.xlu0 %v449, 4
  %v1514 = vpop.permute.xlu0 %1513
  %1515 = vrot.lane.b32.xlu0 %v451, 4
  %v1516 = vpop.permute.xlu0 %1515
  %1517 = vrot.lane.b32.xlu0 %v453, 4
  %v1518 = vpop.permute.xlu0 %1517
  %1519 = vrot.lane.b32.xlu0 %v455, 4
  %v1520 = vpop.permute.xlu0 %1519
  %1521 = vrot.lane.b32.xlu0 %v457, 4
  %v1522 = vpop.permute.xlu0 %1521
  %1523 = vrot.lane.b32.xlu0 %v459, 4
  %v1524 = vpop.permute.xlu0 %1523
  %v1541 = vmul.f32 %v1400, %v1494
  %v1542 = vmul.f32 %v1400, %v1496
  %v1543 = vmul.f32 %v1400, %v1498
  %v1544 = vmul.f32 %v1400, %v1500
  %v1545 = vmul.f32 %v1400, %v1502
  %v1546 = vmul.f32 %v1400, %v1504
  %v1547 = vmul.f32 %v1400, %v1506
  %v1548 = vmul.f32 %v1400, %v1508
  %v1549 = vmul.f32 %v1404, %v1510
  %v1550 = vmul.f32 %v1404, %v1512
  %v1551 = vmul.f32 %v1404, %v1514
  %v1552 = vmul.f32 %v1404, %v1516
  %v1553 = vmul.f32 %v1404, %v1518
  %v1554 = vmul.f32 %v1404, %v1520
  %v1555 = vmul.f32 %v1404, %v1522
  %v1556 = vmul.f32 %v1404, %v1524
  %1573 = vrot.lane.b32.xlu0 %v1541, 124
  %v1574 = vpop.permute.xlu0 %1573
  %1575 = vrot.lane.b32.xlu0 %v1542, 124
  %v1576 = vpop.permute.xlu0 %1575
  %1577 = vrot.lane.b32.xlu0 %v1543, 124
  %v1578 = vpop.permute.xlu0 %1577
  %1579 = vrot.lane.b32.xlu0 %v1544, 124
  %v1580 = vpop.permute.xlu0 %1579
  %1581 = vrot.lane.b32.xlu0 %v1545, 124
  %v1582 = vpop.permute.xlu0 %1581
  %1583 = vrot.lane.b32.xlu0 %v1546, 124
  %v1584 = vpop.permute.xlu0 %1583
  %1585 = vrot.lane.b32.xlu0 %v1547, 124
  %v1586 = vpop.permute.xlu0 %1585
  %1587 = vrot.lane.b32.xlu0 %v1548, 124
  %v1588 = vpop.permute.xlu0 %1587
  %1589 = vrot.lane.b32.xlu0 %v1549, 124
  %v1590 = vpop.permute.xlu0 %1589
  %1591 = vrot.lane.b32.xlu0 %v1550, 124
  %v1592 = vpop.permute.xlu0 %1591
  %1593 = vrot.lane.b32.xlu0 %v1551, 124
  %v1594 = vpop.permute.xlu0 %1593
  %1595 = vrot.lane.b32.xlu0 %v1552, 124
  %v1596 = vpop.permute.xlu0 %1595
  %1597 = vrot.lane.b32.xlu0 %v1553, 124
  %v1598 = vpop.permute.xlu0 %1597
  %1599 = vrot.lane.b32.xlu0 %v1554, 124
  %v1600 = vpop.permute.xlu0 %1599
  %1601 = vrot.lane.b32.xlu0 %v1555, 124
  %v1602 = vpop.permute.xlu0 %1601
  %1603 = vrot.lane.b32.xlu0 %v1556, 124
  %v1604 = vpop.permute.xlu0 %1603
  %v1621 = vadd.f32 %v1461, %v1574
  %v1622 = vadd.f32 %v1462, %v1576
  %v1623 = vadd.f32 %v1463, %v1578
  %v1624 = vadd.f32 %v1464, %v1580
  %v1625 = vadd.f32 %v1465, %v1582
  %v1626 = vadd.f32 %v1466, %v1584
  %v1627 = vadd.f32 %v1467, %v1586
  %v1628 = vadd.f32 %v1468, %v1588
  %v1629 = vadd.f32 %v1469, %v1590
  %v1630 = vadd.f32 %v1470, %v1592
  %v1631 = vadd.f32 %v1471, %v1594
  %v1632 = vadd.f32 %v1472, %v1596
  %v1633 = vadd.f32 %v1473, %v1598
  %v1634 = vadd.f32 %v1474, %v1600
  %v1635 = vadd.f32 %v1475, %v1602
  %v1636 = vadd.f32 %v1476, %v1604
  %1653 = vrot.lane.b32.xlu0 %v525, 4
  %v1654 = vpop.permute.xlu0 %1653
  %1655 = vrot.lane.b32.xlu0 %v527, 4
  %v1656 = vpop.permute.xlu0 %1655
  %1657 = vrot.lane.b32.xlu0 %v529, 4
  %v1658 = vpop.permute.xlu0 %1657
  %1659 = vrot.lane.b32.xlu0 %v531, 4
  %v1660 = vpop.permute.xlu0 %1659
  %1661 = vrot.lane.b32.xlu0 %v533, 4
  %v1662 = vpop.permute.xlu0 %1661
  %1663 = vrot.lane.b32.xlu0 %v535, 4
  %v1664 = vpop.permute.xlu0 %1663
  %1665 = vrot.lane.b32.xlu0 %v537, 4
  %v1666 = vpop.permute.xlu0 %1665
  %1667 = vrot.lane.b32.xlu0 %v539, 4
  %v1668 = vpop.permute.xlu0 %1667
  %1669 = vrot.lane.b32.xlu0 %v541, 4
  %v1670 = vpop.permute.xlu0 %1669
  %1671 = vrot.lane.b32.xlu0 %v543, 4
  %v1672 = vpop.permute.xlu0 %1671
  %1673 = vrot.lane.b32.xlu0 %v545, 4
  %v1674 = vpop.permute.xlu0 %1673
  %1675 = vrot.lane.b32.xlu0 %v547, 4
  %v1676 = vpop.permute.xlu0 %1675
  %1677 = vrot.lane.b32.xlu0 %v549, 4
  %v1678 = vpop.permute.xlu0 %1677
  %1679 = vrot.lane.b32.xlu0 %v551, 4
  %v1680 = vpop.permute.xlu0 %1679
  %1681 = vrot.lane.b32.xlu0 %v553, 4
  %v1682 = vpop.permute.xlu0 %1681
  %1683 = vrot.lane.b32.xlu0 %v555, 4
  %v1684 = vpop.permute.xlu0 %1683
  %v1701 = vmul.f32 %v1438, %v1654
  %v1702 = vmul.f32 %v1438, %v1656
  %v1703 = vmul.f32 %v1438, %v1658
  %v1704 = vmul.f32 %v1438, %v1660
  %v1705 = vmul.f32 %v1438, %v1662
  %v1706 = vmul.f32 %v1438, %v1664
  %v1707 = vmul.f32 %v1438, %v1666
  %v1708 = vmul.f32 %v1438, %v1668
  %v1709 = vmul.f32 %v1442, %v1670
  %v1710 = vmul.f32 %v1442, %v1672
  %v1711 = vmul.f32 %v1442, %v1674
  %v1712 = vmul.f32 %v1442, %v1676
  %v1713 = vmul.f32 %v1442, %v1678
  %v1714 = vmul.f32 %v1442, %v1680
  %v1715 = vmul.f32 %v1442, %v1682
  %v1716 = vmul.f32 %v1442, %v1684
  %1733 = vrot.lane.b32.xlu0 %v1701, 124
  %v1734 = vpop.permute.xlu0 %1733
  %1735 = vrot.lane.b32.xlu0 %v1702, 124
  %v1736 = vpop.permute.xlu0 %1735
  %1737 = vrot.lane.b32.xlu0 %v1703, 124
  %v1738 = vpop.permute.xlu0 %1737
  %1739 = vrot.lane.b32.xlu0 %v1704, 124
  %v1740 = vpop.permute.xlu0 %1739
  %1741 = vrot.lane.b32.xlu0 %v1705, 124
  %v1742 = vpop.permute.xlu0 %1741
  %1743 = vrot.lane.b32.xlu0 %v1706, 124
  %v1744 = vpop.permute.xlu0 %1743
  %1745 = vrot.lane.b32.xlu0 %v1707, 124
  %v1746 = vpop.permute.xlu0 %1745
  %1747 = vrot.lane.b32.xlu0 %v1708, 124
  %v1748 = vpop.permute.xlu0 %1747
  %1749 = vrot.lane.b32.xlu0 %v1709, 124
  %v1750 = vpop.permute.xlu0 %1749
  %1751 = vrot.lane.b32.xlu0 %v1710, 124
  %v1752 = vpop.permute.xlu0 %1751
  %1753 = vrot.lane.b32.xlu0 %v1711, 124
  %v1754 = vpop.permute.xlu0 %1753
  %1755 = vrot.lane.b32.xlu0 %v1712, 124
  %v1756 = vpop.permute.xlu0 %1755
  %1757 = vrot.lane.b32.xlu0 %v1713, 124
  %v1758 = vpop.permute.xlu0 %1757
  %1759 = vrot.lane.b32.xlu0 %v1714, 124
  %v1760 = vpop.permute.xlu0 %1759
  %1761 = vrot.lane.b32.xlu0 %v1715, 124
  %v1762 = vpop.permute.xlu0 %1761
  %1763 = vrot.lane.b32.xlu0 %v1716, 124
  %v1764 = vpop.permute.xlu0 %1763
  %v1781 = vadd.f32 %v1621, %v1734
  %v1782 = vadd.f32 %v1622, %v1736
  %v1783 = vadd.f32 %v1623, %v1738
  %v1784 = vadd.f32 %v1624, %v1740
  %v1785 = vadd.f32 %v1625, %v1742
  %v1786 = vadd.f32 %v1626, %v1744
  %v1787 = vadd.f32 %v1627, %v1746
  %v1788 = vadd.f32 %v1628, %v1748
  %v1789 = vadd.f32 %v1629, %v1750
  %v1790 = vadd.f32 %v1630, %v1752
  %v1791 = vadd.f32 %v1631, %v1754
  %v1792 = vadd.f32 %v1632, %v1756
  %v1793 = vadd.f32 %v1633, %v1758
  %v1794 = vadd.f32 %v1634, %v1760
  %v1795 = vadd.f32 %v1635, %v1762
  %v1796 = vadd.f32 %v1636, %v1764
  %1799 = vrot.lane.b32.xlu0 %v1423, 120
  %v1800 = vpop.permute.xlu0 %1799
  %1801 = vrot.lane.b32.xlu0 %v1424, 120
  %v1802 = vpop.permute.xlu0 %1801
  %v1805 = vadd.f32 %v1387, %v1800
  %v1806 = vadd.f32 %v1394, %v1802
  %v1809 = vlaneseq
  %v1810 = vshrl.u32 %v1809, 7
  %v1811 = vsub.s32 0, %v1810
  %v1812 = vrot.slane %v1805, %v1811
  %v1813 = vlaneseq
  %v1814 = vshrl.u32 %v1813, 7
  %v1815 = vsub.s32 0, %v1814
  %v1816 = vrot.slane %v1806, %v1815
  %v1819 = vmul.f32 %v1812, %v237
  %v1820 = vmul.f32 %v1812, %v238
  %v1821 = vmul.f32 %v1812, %v239
  %v1822 = vmul.f32 %v1812, %v240
  %v1823 = vmul.f32 %v1812, %v241
  %v1824 = vmul.f32 %v1812, %v242
  %v1825 = vmul.f32 %v1812, %v243
  %v1826 = vmul.f32 %v1812, %v244
  %v1827 = vmul.f32 %v1812, %v245
  %v1828 = vmul.f32 %v1812, %v246
  %v1829 = vmul.f32 %v1812, %v247
  %v1830 = vmul.f32 %v1812, %v248
  %v1831 = vmul.f32 %v1812, %v249
  %v1832 = vmul.f32 %v1812, %v250
  %v1833 = vmul.f32 %v1812, %v251
  %v1834 = vmul.f32 %v1812, %v252
  %v1835 = vmul.f32 %v1816, %v253
  %v1836 = vmul.f32 %v1816, %v254
  %v1837 = vmul.f32 %v1816, %v255
  %v1838 = vmul.f32 %v1816, %v256
  %v1839 = vmul.f32 %v1816, %v257
  %v1840 = vmul.f32 %v1816, %v258
  %v1841 = vmul.f32 %v1816, %v259
  %v1842 = vmul.f32 %v1816, %v260
  %v1843 = vmul.f32 %v1816, %v261
  %v1844 = vmul.f32 %v1816, %v262
  %v1845 = vmul.f32 %v1816, %v263
  %v1846 = vmul.f32 %v1816, %v264
  %v1847 = vmul.f32 %v1816, %v265
  %v1848 = vmul.f32 %v1816, %v266
  %v1849 = vmul.f32 %v1816, %v267
  %v1850 = vmul.f32 %v1816, %v268
  %1883 = vrot.lane.b32.xlu0 %v333, 8
  %v1884 = vpop.permute.xlu0 %1883
  %1885 = vrot.lane.b32.xlu0 %v334, 8
  %v1886 = vpop.permute.xlu0 %1885
  %1887 = vrot.lane.b32.xlu0 %v335, 8
  %v1888 = vpop.permute.xlu0 %1887
  %1889 = vrot.lane.b32.xlu0 %v336, 8
  %v1890 = vpop.permute.xlu0 %1889
  %1891 = vrot.lane.b32.xlu0 %v337, 8
  %v1892 = vpop.permute.xlu0 %1891
  %1893 = vrot.lane.b32.xlu0 %v338, 8
  %v1894 = vpop.permute.xlu0 %1893
  %1895 = vrot.lane.b32.xlu0 %v339, 8
  %v1896 = vpop.permute.xlu0 %1895
  %1897 = vrot.lane.b32.xlu0 %v340, 8
  %v1898 = vpop.permute.xlu0 %1897
  %1899 = vrot.lane.b32.xlu0 %v341, 8
  %v1900 = vpop.permute.xlu0 %1899
  %1901 = vrot.lane.b32.xlu0 %v342, 8
  %v1902 = vpop.permute.xlu0 %1901
  %1903 = vrot.lane.b32.xlu0 %v343, 8
  %v1904 = vpop.permute.xlu0 %1903
  %1905 = vrot.lane.b32.xlu0 %v344, 8
  %v1906 = vpop.permute.xlu0 %1905
  %1907 = vrot.lane.b32.xlu0 %v345, 8
  %v1908 = vpop.permute.xlu0 %1907
  %1909 = vrot.lane.b32.xlu0 %v346, 8
  %v1910 = vpop.permute.xlu0 %1909
  %1911 = vrot.lane.b32.xlu0 %v347, 8
  %v1912 = vpop.permute.xlu0 %1911
  %1913 = vrot.lane.b32.xlu0 %v348, 8
  %v1914 = vpop.permute.xlu0 %1913
  %1915 = vrot.lane.b32.xlu0 %v349, 8
  %v1916 = vpop.permute.xlu0 %1915
  %1917 = vrot.lane.b32.xlu0 %v350, 8
  %v1918 = vpop.permute.xlu0 %1917
  %1919 = vrot.lane.b32.xlu0 %v351, 8
  %v1920 = vpop.permute.xlu0 %1919
  %1921 = vrot.lane.b32.xlu0 %v352, 8
  %v1922 = vpop.permute.xlu0 %1921
  %1923 = vrot.lane.b32.xlu0 %v353, 8
  %v1924 = vpop.permute.xlu0 %1923
  %1925 = vrot.lane.b32.xlu0 %v354, 8
  %v1926 = vpop.permute.xlu0 %1925
  %1927 = vrot.lane.b32.xlu0 %v355, 8
  %v1928 = vpop.permute.xlu0 %1927
  %1929 = vrot.lane.b32.xlu0 %v356, 8
  %v1930 = vpop.permute.xlu0 %1929
  %1931 = vrot.lane.b32.xlu0 %v357, 8
  %v1932 = vpop.permute.xlu0 %1931
  %1933 = vrot.lane.b32.xlu0 %v358, 8
  %v1934 = vpop.permute.xlu0 %1933
  %1935 = vrot.lane.b32.xlu0 %v359, 8
  %v1936 = vpop.permute.xlu0 %1935
  %1937 = vrot.lane.b32.xlu0 %v360, 8
  %v1938 = vpop.permute.xlu0 %1937
  %1939 = vrot.lane.b32.xlu0 %v361, 8
  %v1940 = vpop.permute.xlu0 %1939
  %1941 = vrot.lane.b32.xlu0 %v362, 8
  %v1942 = vpop.permute.xlu0 %1941
  %1943 = vrot.lane.b32.xlu0 %v363, 8
  %v1944 = vpop.permute.xlu0 %1943
  %1945 = vrot.lane.b32.xlu0 %v364, 8
  %v1946 = vpop.permute.xlu0 %1945
  %v1979 = vmul.f32 %v1400, %v1884
  %v1980 = vmul.f32 %v1400, %v1886
  %v1981 = vmul.f32 %v1400, %v1888
  %v1982 = vmul.f32 %v1400, %v1890
  %v1983 = vmul.f32 %v1400, %v1892
  %v1984 = vmul.f32 %v1400, %v1894
  %v1985 = vmul.f32 %v1400, %v1896
  %v1986 = vmul.f32 %v1400, %v1898
  %v1987 = vmul.f32 %v1400, %v1900
  %v1988 = vmul.f32 %v1400, %v1902
  %v1989 = vmul.f32 %v1400, %v1904
  %v1990 = vmul.f32 %v1400, %v1906
  %v1991 = vmul.f32 %v1400, %v1908
  %v1992 = vmul.f32 %v1400, %v1910
  %v1993 = vmul.f32 %v1400, %v1912
  %v1994 = vmul.f32 %v1400, %v1914
  %v1995 = vmul.f32 %v1404, %v1916
  %v1996 = vmul.f32 %v1404, %v1918
  %v1997 = vmul.f32 %v1404, %v1920
  %v1998 = vmul.f32 %v1404, %v1922
  %v1999 = vmul.f32 %v1404, %v1924
  %v2000 = vmul.f32 %v1404, %v1926
  %v2001 = vmul.f32 %v1404, %v1928
  %v2002 = vmul.f32 %v1404, %v1930
  %v2003 = vmul.f32 %v1404, %v1932
  %v2004 = vmul.f32 %v1404, %v1934
  %v2005 = vmul.f32 %v1404, %v1936
  %v2006 = vmul.f32 %v1404, %v1938
  %v2007 = vmul.f32 %v1404, %v1940
  %v2008 = vmul.f32 %v1404, %v1942
  %v2009 = vmul.f32 %v1404, %v1944
  %v2010 = vmul.f32 %v1404, %v1946
  %2043 = vrot.lane.b32.xlu0 %v1979, 120
  %v2044 = vpop.permute.xlu0 %2043
  %2045 = vrot.lane.b32.xlu0 %v1980, 120
  %v2046 = vpop.permute.xlu0 %2045
  %2047 = vrot.lane.b32.xlu0 %v1981, 120
  %v2048 = vpop.permute.xlu0 %2047
  %2049 = vrot.lane.b32.xlu0 %v1982, 120
  %v2050 = vpop.permute.xlu0 %2049
  %2051 = vrot.lane.b32.xlu0 %v1983, 120
  %v2052 = vpop.permute.xlu0 %2051
  %2053 = vrot.lane.b32.xlu0 %v1984, 120
  %v2054 = vpop.permute.xlu0 %2053
  %2055 = vrot.lane.b32.xlu0 %v1985, 120
  %v2056 = vpop.permute.xlu0 %2055
  %2057 = vrot.lane.b32.xlu0 %v1986, 120
  %v2058 = vpop.permute.xlu0 %2057
  %2059 = vrot.lane.b32.xlu0 %v1987, 120
  %v2060 = vpop.permute.xlu0 %2059
  %2061 = vrot.lane.b32.xlu0 %v1988, 120
  %v2062 = vpop.permute.xlu0 %2061
  %2063 = vrot.lane.b32.xlu0 %v1989, 120
  %v2064 = vpop.permute.xlu0 %2063
  %2065 = vrot.lane.b32.xlu0 %v1990, 120
  %v2066 = vpop.permute.xlu0 %2065
  %2067 = vrot.lane.b32.xlu0 %v1991, 120
  %v2068 = vpop.permute.xlu0 %2067
  %2069 = vrot.lane.b32.xlu0 %v1992, 120
  %v2070 = vpop.permute.xlu0 %2069
  %2071 = vrot.lane.b32.xlu0 %v1993, 120
  %v2072 = vpop.permute.xlu0 %2071
  %2073 = vrot.lane.b32.xlu0 %v1994, 120
  %v2074 = vpop.permute.xlu0 %2073
  %2075 = vrot.lane.b32.xlu0 %v1995, 120
  %v2076 = vpop.permute.xlu0 %2075
  %2077 = vrot.lane.b32.xlu0 %v1996, 120
  %v2078 = vpop.permute.xlu0 %2077
  %2079 = vrot.lane.b32.xlu0 %v1997, 120
  %v2080 = vpop.permute.xlu0 %2079
  %2081 = vrot.lane.b32.xlu0 %v1998, 120
  %v2082 = vpop.permute.xlu0 %2081
  %2083 = vrot.lane.b32.xlu0 %v1999, 120
  %v2084 = vpop.permute.xlu0 %2083
  %2085 = vrot.lane.b32.xlu0 %v2000, 120
  %v2086 = vpop.permute.xlu0 %2085
  %2087 = vrot.lane.b32.xlu0 %v2001, 120
  %v2088 = vpop.permute.xlu0 %2087
  %2089 = vrot.lane.b32.xlu0 %v2002, 120
  %v2090 = vpop.permute.xlu0 %2089
  %2091 = vrot.lane.b32.xlu0 %v2003, 120
  %v2092 = vpop.permute.xlu0 %2091
  %2093 = vrot.lane.b32.xlu0 %v2004, 120
  %v2094 = vpop.permute.xlu0 %2093
  %2095 = vrot.lane.b32.xlu0 %v2005, 120
  %v2096 = vpop.permute.xlu0 %2095
  %2097 = vrot.lane.b32.xlu0 %v2006, 120
  %v2098 = vpop.permute.xlu0 %2097
  %2099 = vrot.lane.b32.xlu0 %v2007, 120
  %v2100 = vpop.permute.xlu0 %2099
  %2101 = vrot.lane.b32.xlu0 %v2008, 120
  %v2102 = vpop.permute.xlu0 %2101
  %2103 = vrot.lane.b32.xlu0 %v2009, 120
  %v2104 = vpop.permute.xlu0 %2103
  %2105 = vrot.lane.b32.xlu0 %v2010, 120
  %v2106 = vpop.permute.xlu0 %2105
  %v2139 = vadd.f32 %v1819, %v2044
  %v2140 = vadd.f32 %v1820, %v2046
  %v2141 = vadd.f32 %v1821, %v2048
  %v2142 = vadd.f32 %v1822, %v2050
  %v2143 = vadd.f32 %v1823, %v2052
  %v2144 = vadd.f32 %v1824, %v2054
  %v2145 = vadd.f32 %v1825, %v2056
  %v2146 = vadd.f32 %v1826, %v2058
  %v2147 = vadd.f32 %v1827, %v2060
  %v2148 = vadd.f32 %v1828, %v2062
  %v2149 = vadd.f32 %v1829, %v2064
  %v2150 = vadd.f32 %v1830, %v2066
  %v2151 = vadd.f32 %v1831, %v2068
  %v2152 = vadd.f32 %v1832, %v2070
  %v2153 = vadd.f32 %v1833, %v2072
  %v2154 = vadd.f32 %v1834, %v2074
  %v2155 = vadd.f32 %v1835, %v2076
  %v2156 = vadd.f32 %v1836, %v2078
  %v2157 = vadd.f32 %v1837, %v2080
  %v2158 = vadd.f32 %v1838, %v2082
  %v2159 = vadd.f32 %v1839, %v2084
  %v2160 = vadd.f32 %v1840, %v2086
  %v2161 = vadd.f32 %v1841, %v2088
  %v2162 = vadd.f32 %v1842, %v2090
  %v2163 = vadd.f32 %v1843, %v2092
  %v2164 = vadd.f32 %v1844, %v2094
  %v2165 = vadd.f32 %v1845, %v2096
  %v2166 = vadd.f32 %v1846, %v2098
  %v2167 = vadd.f32 %v1847, %v2100
  %v2168 = vadd.f32 %v1848, %v2102
  %v2169 = vadd.f32 %v1849, %v2104
  %v2170 = vadd.f32 %v1850, %v2106
  %2187 = vrot.lane.b32.xlu0 %v430, 4
  %v2188 = vpop.permute.xlu0 %2187
  %2189 = vrot.lane.b32.xlu0 %v432, 4
  %v2190 = vpop.permute.xlu0 %2189
  %2191 = vrot.lane.b32.xlu0 %v434, 4
  %v2192 = vpop.permute.xlu0 %2191
  %2193 = vrot.lane.b32.xlu0 %v436, 4
  %v2194 = vpop.permute.xlu0 %2193
  %2195 = vrot.lane.b32.xlu0 %v438, 4
  %v2196 = vpop.permute.xlu0 %2195
  %2197 = vrot.lane.b32.xlu0 %v440, 4
  %v2198 = vpop.permute.xlu0 %2197
  %2199 = vrot.lane.b32.xlu0 %v442, 4
  %v2200 = vpop.permute.xlu0 %2199
  %2201 = vrot.lane.b32.xlu0 %v444, 4
  %v2202 = vpop.permute.xlu0 %2201
  %2203 = vrot.lane.b32.xlu0 %v446, 4
  %v2204 = vpop.permute.xlu0 %2203
  %2205 = vrot.lane.b32.xlu0 %v448, 4
  %v2206 = vpop.permute.xlu0 %2205
  %2207 = vrot.lane.b32.xlu0 %v450, 4
  %v2208 = vpop.permute.xlu0 %2207
  %2209 = vrot.lane.b32.xlu0 %v452, 4
  %v2210 = vpop.permute.xlu0 %2209
  %2211 = vrot.lane.b32.xlu0 %v454, 4
  %v2212 = vpop.permute.xlu0 %2211
  %2213 = vrot.lane.b32.xlu0 %v456, 4
  %v2214 = vpop.permute.xlu0 %2213
  %2215 = vrot.lane.b32.xlu0 %v458, 4
  %v2216 = vpop.permute.xlu0 %2215
  %2217 = vrot.lane.b32.xlu0 %v460, 4
  %v2218 = vpop.permute.xlu0 %2217
  %v2235 = vmul.f32 %v1812, %v1494
  %v2236 = vmul.f32 %v1812, %v2188
  %v2237 = vmul.f32 %v1812, %v1496
  %v2238 = vmul.f32 %v1812, %v2190
  %v2239 = vmul.f32 %v1812, %v1498
  %v2240 = vmul.f32 %v1812, %v2192
  %v2241 = vmul.f32 %v1812, %v1500
  %v2242 = vmul.f32 %v1812, %v2194
  %v2243 = vmul.f32 %v1812, %v1502
  %v2244 = vmul.f32 %v1812, %v2196
  %v2245 = vmul.f32 %v1812, %v1504
  %v2246 = vmul.f32 %v1812, %v2198
  %v2247 = vmul.f32 %v1812, %v1506
  %v2248 = vmul.f32 %v1812, %v2200
  %v2249 = vmul.f32 %v1812, %v1508
  %v2250 = vmul.f32 %v1812, %v2202
  %v2251 = vmul.f32 %v1816, %v1510
  %v2252 = vmul.f32 %v1816, %v2204
  %v2253 = vmul.f32 %v1816, %v1512
  %v2254 = vmul.f32 %v1816, %v2206
  %v2255 = vmul.f32 %v1816, %v1514
  %v2256 = vmul.f32 %v1816, %v2208
  %v2257 = vmul.f32 %v1816, %v1516
  %v2258 = vmul.f32 %v1816, %v2210
  %v2259 = vmul.f32 %v1816, %v1518
  %v2260 = vmul.f32 %v1816, %v2212
  %v2261 = vmul.f32 %v1816, %v1520
  %v2262 = vmul.f32 %v1816, %v2214
  %v2263 = vmul.f32 %v1816, %v1522
  %v2264 = vmul.f32 %v1816, %v2216
  %v2265 = vmul.f32 %v1816, %v1524
  %v2266 = vmul.f32 %v1816, %v2218
  %2299 = vrot.lane.b32.xlu0 %v2235, 124
  %v2300 = vpop.permute.xlu0 %2299
  %2301 = vrot.lane.b32.xlu0 %v2236, 124
  %v2302 = vpop.permute.xlu0 %2301
  %2303 = vrot.lane.b32.xlu0 %v2237, 124
  %v2304 = vpop.permute.xlu0 %2303
  %2305 = vrot.lane.b32.xlu0 %v2238, 124
  %v2306 = vpop.permute.xlu0 %2305
  %2307 = vrot.lane.b32.xlu0 %v2239, 124
  %v2308 = vpop.permute.xlu0 %2307
  %2309 = vrot.lane.b32.xlu0 %v2240, 124
  %v2310 = vpop.permute.xlu0 %2309
  %2311 = vrot.lane.b32.xlu0 %v2241, 124
  %v2312 = vpop.permute.xlu0 %2311
  %2313 = vrot.lane.b32.xlu0 %v2242, 124
  %v2314 = vpop.permute.xlu0 %2313
  %2315 = vrot.lane.b32.xlu0 %v2243, 124
  %v2316 = vpop.permute.xlu0 %2315
  %2317 = vrot.lane.b32.xlu0 %v2244, 124
  %v2318 = vpop.permute.xlu0 %2317
  %2319 = vrot.lane.b32.xlu0 %v2245, 124
  %v2320 = vpop.permute.xlu0 %2319
  %2321 = vrot.lane.b32.xlu0 %v2246, 124
  %v2322 = vpop.permute.xlu0 %2321
  %2323 = vrot.lane.b32.xlu0 %v2247, 124
  %v2324 = vpop.permute.xlu0 %2323
  %2325 = vrot.lane.b32.xlu0 %v2248, 124
  %v2326 = vpop.permute.xlu0 %2325
  %2327 = vrot.lane.b32.xlu0 %v2249, 124
  %v2328 = vpop.permute.xlu0 %2327
  %2329 = vrot.lane.b32.xlu0 %v2250, 124
  %v2330 = vpop.permute.xlu0 %2329
  %2331 = vrot.lane.b32.xlu0 %v2251, 124
  %v2332 = vpop.permute.xlu0 %2331
  %2333 = vrot.lane.b32.xlu0 %v2252, 124
  %v2334 = vpop.permute.xlu0 %2333
  %2335 = vrot.lane.b32.xlu0 %v2253, 124
  %v2336 = vpop.permute.xlu0 %2335
  %2337 = vrot.lane.b32.xlu0 %v2254, 124
  %v2338 = vpop.permute.xlu0 %2337
  %2339 = vrot.lane.b32.xlu0 %v2255, 124
  %v2340 = vpop.permute.xlu0 %2339
  %2341 = vrot.lane.b32.xlu0 %v2256, 124
  %v2342 = vpop.permute.xlu0 %2341
  %2343 = vrot.lane.b32.xlu0 %v2257, 124
  %v2344 = vpop.permute.xlu0 %2343
  %2345 = vrot.lane.b32.xlu0 %v2258, 124
  %v2346 = vpop.permute.xlu0 %2345
  %2347 = vrot.lane.b32.xlu0 %v2259, 124
  %v2348 = vpop.permute.xlu0 %2347
  %2349 = vrot.lane.b32.xlu0 %v2260, 124
  %v2350 = vpop.permute.xlu0 %2349
  %2351 = vrot.lane.b32.xlu0 %v2261, 124
  %v2352 = vpop.permute.xlu0 %2351
  %2353 = vrot.lane.b32.xlu0 %v2262, 124
  %v2354 = vpop.permute.xlu0 %2353
  %2355 = vrot.lane.b32.xlu0 %v2263, 124
  %v2356 = vpop.permute.xlu0 %2355
  %2357 = vrot.lane.b32.xlu0 %v2264, 124
  %v2358 = vpop.permute.xlu0 %2357
  %2359 = vrot.lane.b32.xlu0 %v2265, 124
  %v2360 = vpop.permute.xlu0 %2359
  %2361 = vrot.lane.b32.xlu0 %v2266, 124
  %v2362 = vpop.permute.xlu0 %2361
  %v2395 = vadd.f32 %v2139, %v2300
  %v2396 = vadd.f32 %v2140, %v2302
  %v2397 = vadd.f32 %v2141, %v2304
  %v2398 = vadd.f32 %v2142, %v2306
  %v2399 = vadd.f32 %v2143, %v2308
  %v2400 = vadd.f32 %v2144, %v2310
  %v2401 = vadd.f32 %v2145, %v2312
  %v2402 = vadd.f32 %v2146, %v2314
  %v2403 = vadd.f32 %v2147, %v2316
  %v2404 = vadd.f32 %v2148, %v2318
  %v2405 = vadd.f32 %v2149, %v2320
  %v2406 = vadd.f32 %v2150, %v2322
  %v2407 = vadd.f32 %v2151, %v2324
  %v2408 = vadd.f32 %v2152, %v2326
  %v2409 = vadd.f32 %v2153, %v2328
  %v2410 = vadd.f32 %v2154, %v2330
  %v2411 = vadd.f32 %v2155, %v2332
  %v2412 = vadd.f32 %v2156, %v2334
  %v2413 = vadd.f32 %v2157, %v2336
  %v2414 = vadd.f32 %v2158, %v2338
  %v2415 = vadd.f32 %v2159, %v2340
  %v2416 = vadd.f32 %v2160, %v2342
  %v2417 = vadd.f32 %v2161, %v2344
  %v2418 = vadd.f32 %v2162, %v2346
  %v2419 = vadd.f32 %v2163, %v2348
  %v2420 = vadd.f32 %v2164, %v2350
  %v2421 = vadd.f32 %v2165, %v2352
  %v2422 = vadd.f32 %v2166, %v2354
  %v2423 = vadd.f32 %v2167, %v2356
  %v2424 = vadd.f32 %v2168, %v2358
  %v2425 = vadd.f32 %v2169, %v2360
  %v2426 = vadd.f32 %v2170, %v2362
  %2443 = vrot.lane.b32.xlu0 %v525, 12
  %v2444 = vpop.permute.xlu0 %2443
  %2445 = vrot.lane.b32.xlu0 %v526, 12
  %v2446 = vpop.permute.xlu0 %2445
  %2447 = vrot.lane.b32.xlu0 %v527, 12
  %v2448 = vpop.permute.xlu0 %2447
  %2449 = vrot.lane.b32.xlu0 %v528, 12
  %v2450 = vpop.permute.xlu0 %2449
  %2451 = vrot.lane.b32.xlu0 %v529, 12
  %v2452 = vpop.permute.xlu0 %2451
  %2453 = vrot.lane.b32.xlu0 %v530, 12
  %v2454 = vpop.permute.xlu0 %2453
  %2455 = vrot.lane.b32.xlu0 %v531, 12
  %v2456 = vpop.permute.xlu0 %2455
  %2457 = vrot.lane.b32.xlu0 %v532, 12
  %v2458 = vpop.permute.xlu0 %2457
  %2459 = vrot.lane.b32.xlu0 %v533, 12
  %v2460 = vpop.permute.xlu0 %2459
  %2461 = vrot.lane.b32.xlu0 %v534, 12
  %v2462 = vpop.permute.xlu0 %2461
  %2463 = vrot.lane.b32.xlu0 %v535, 12
  %v2464 = vpop.permute.xlu0 %2463
  %2465 = vrot.lane.b32.xlu0 %v536, 12
  %v2466 = vpop.permute.xlu0 %2465
  %2467 = vrot.lane.b32.xlu0 %v537, 12
  %v2468 = vpop.permute.xlu0 %2467
  %2469 = vrot.lane.b32.xlu0 %v538, 12
  %v2470 = vpop.permute.xlu0 %2469
  %2471 = vrot.lane.b32.xlu0 %v539, 12
  %v2472 = vpop.permute.xlu0 %2471
  %2473 = vrot.lane.b32.xlu0 %v540, 12
  %v2474 = vpop.permute.xlu0 %2473
  %2475 = vrot.lane.b32.xlu0 %v541, 12
  %v2476 = vpop.permute.xlu0 %2475
  %2477 = vrot.lane.b32.xlu0 %v542, 12
  %v2478 = vpop.permute.xlu0 %2477
  %2479 = vrot.lane.b32.xlu0 %v543, 12
  %v2480 = vpop.permute.xlu0 %2479
  %2481 = vrot.lane.b32.xlu0 %v544, 12
  %v2482 = vpop.permute.xlu0 %2481
  %2483 = vrot.lane.b32.xlu0 %v545, 12
  %v2484 = vpop.permute.xlu0 %2483
  %2485 = vrot.lane.b32.xlu0 %v546, 12
  %v2486 = vpop.permute.xlu0 %2485
  %2487 = vrot.lane.b32.xlu0 %v547, 12
  %v2488 = vpop.permute.xlu0 %2487
  %2489 = vrot.lane.b32.xlu0 %v548, 12
  %v2490 = vpop.permute.xlu0 %2489
  %2491 = vrot.lane.b32.xlu0 %v549, 12
  %v2492 = vpop.permute.xlu0 %2491
  %2493 = vrot.lane.b32.xlu0 %v550, 12
  %v2494 = vpop.permute.xlu0 %2493
  %2495 = vrot.lane.b32.xlu0 %v551, 12
  %v2496 = vpop.permute.xlu0 %2495
  %2497 = vrot.lane.b32.xlu0 %v552, 12
  %v2498 = vpop.permute.xlu0 %2497
  %2499 = vrot.lane.b32.xlu0 %v553, 12
  %v2500 = vpop.permute.xlu0 %2499
  %2501 = vrot.lane.b32.xlu0 %v554, 12
  %v2502 = vpop.permute.xlu0 %2501
  %2503 = vrot.lane.b32.xlu0 %v555, 12
  %v2504 = vpop.permute.xlu0 %2503
  %2505 = vrot.lane.b32.xlu0 %v556, 12
  %v2506 = vpop.permute.xlu0 %2505
  %v2539 = vmul.f32 %v1400, %v2444
  %v2540 = vmul.f32 %v1400, %v2446
  %v2541 = vmul.f32 %v1400, %v2448
  %v2542 = vmul.f32 %v1400, %v2450
  %v2543 = vmul.f32 %v1400, %v2452
  %v2544 = vmul.f32 %v1400, %v2454
  %v2545 = vmul.f32 %v1400, %v2456
  %v2546 = vmul.f32 %v1400, %v2458
  %v2547 = vmul.f32 %v1400, %v2460
  %v2548 = vmul.f32 %v1400, %v2462
  %v2549 = vmul.f32 %v1400, %v2464
  %v2550 = vmul.f32 %v1400, %v2466
  %v2551 = vmul.f32 %v1400, %v2468
  %v2552 = vmul.f32 %v1400, %v2470
  %v2553 = vmul.f32 %v1400, %v2472
  %v2554 = vmul.f32 %v1400, %v2474
  %v2555 = vmul.f32 %v1404, %v2476
  %v2556 = vmul.f32 %v1404, %v2478
  %v2557 = vmul.f32 %v1404, %v2480
  %v2558 = vmul.f32 %v1404, %v2482
  %v2559 = vmul.f32 %v1404, %v2484
  %v2560 = vmul.f32 %v1404, %v2486
  %v2561 = vmul.f32 %v1404, %v2488
  %v2562 = vmul.f32 %v1404, %v2490
  %v2563 = vmul.f32 %v1404, %v2492
  %v2564 = vmul.f32 %v1404, %v2494
  %v2565 = vmul.f32 %v1404, %v2496
  %v2566 = vmul.f32 %v1404, %v2498
  %v2567 = vmul.f32 %v1404, %v2500
  %v2568 = vmul.f32 %v1404, %v2502
  %v2569 = vmul.f32 %v1404, %v2504
  %v2570 = vmul.f32 %v1404, %v2506
  %2603 = vrot.lane.b32.xlu0 %v2539, 116
  %v2604 = vpop.permute.xlu0 %2603
  %2605 = vrot.lane.b32.xlu0 %v2540, 116
  %v2606 = vpop.permute.xlu0 %2605
  %2607 = vrot.lane.b32.xlu0 %v2541, 116
  %v2608 = vpop.permute.xlu0 %2607
  %2609 = vrot.lane.b32.xlu0 %v2542, 116
  %v2610 = vpop.permute.xlu0 %2609
  %2611 = vrot.lane.b32.xlu0 %v2543, 116
  %v2612 = vpop.permute.xlu0 %2611
  %2613 = vrot.lane.b32.xlu0 %v2544, 116
  %v2614 = vpop.permute.xlu0 %2613
  %2615 = vrot.lane.b32.xlu0 %v2545, 116
  %v2616 = vpop.permute.xlu0 %2615
  %2617 = vrot.lane.b32.xlu0 %v2546, 116
  %v2618 = vpop.permute.xlu0 %2617
  %2619 = vrot.lane.b32.xlu0 %v2547, 116
  %v2620 = vpop.permute.xlu0 %2619
  %2621 = vrot.lane.b32.xlu0 %v2548, 116
  %v2622 = vpop.permute.xlu0 %2621
  %2623 = vrot.lane.b32.xlu0 %v2549, 116
  %v2624 = vpop.permute.xlu0 %2623
  %2625 = vrot.lane.b32.xlu0 %v2550, 116
  %v2626 = vpop.permute.xlu0 %2625
  %2627 = vrot.lane.b32.xlu0 %v2551, 116
  %v2628 = vpop.permute.xlu0 %2627
  %2629 = vrot.lane.b32.xlu0 %v2552, 116
  %v2630 = vpop.permute.xlu0 %2629
  %2631 = vrot.lane.b32.xlu0 %v2553, 116
  %v2632 = vpop.permute.xlu0 %2631
  %2633 = vrot.lane.b32.xlu0 %v2554, 116
  %v2634 = vpop.permute.xlu0 %2633
  %2635 = vrot.lane.b32.xlu0 %v2555, 116
  %v2636 = vpop.permute.xlu0 %2635
  %2637 = vrot.lane.b32.xlu0 %v2556, 116
  %v2638 = vpop.permute.xlu0 %2637
  %2639 = vrot.lane.b32.xlu0 %v2557, 116
  %v2640 = vpop.permute.xlu0 %2639
  %2641 = vrot.lane.b32.xlu0 %v2558, 116
  %v2642 = vpop.permute.xlu0 %2641
  %2643 = vrot.lane.b32.xlu0 %v2559, 116
  %v2644 = vpop.permute.xlu0 %2643
  %2645 = vrot.lane.b32.xlu0 %v2560, 116
  %v2646 = vpop.permute.xlu0 %2645
  %2647 = vrot.lane.b32.xlu0 %v2561, 116
  %v2648 = vpop.permute.xlu0 %2647
  %2649 = vrot.lane.b32.xlu0 %v2562, 116
  %v2650 = vpop.permute.xlu0 %2649
  %2651 = vrot.lane.b32.xlu0 %v2563, 116
  %v2652 = vpop.permute.xlu0 %2651
  %2653 = vrot.lane.b32.xlu0 %v2564, 116
  %v2654 = vpop.permute.xlu0 %2653
  %2655 = vrot.lane.b32.xlu0 %v2565, 116
  %v2656 = vpop.permute.xlu0 %2655
  %2657 = vrot.lane.b32.xlu0 %v2566, 116
  %v2658 = vpop.permute.xlu0 %2657
  %2659 = vrot.lane.b32.xlu0 %v2567, 116
  %v2660 = vpop.permute.xlu0 %2659
  %2661 = vrot.lane.b32.xlu0 %v2568, 116
  %v2662 = vpop.permute.xlu0 %2661
  %2663 = vrot.lane.b32.xlu0 %v2569, 116
  %v2664 = vpop.permute.xlu0 %2663
  %2665 = vrot.lane.b32.xlu0 %v2570, 116
  %v2666 = vpop.permute.xlu0 %2665
  %v2699 = vadd.f32 %v2395, %v2604
  %v2700 = vadd.f32 %v2396, %v2606
  %v2701 = vadd.f32 %v2397, %v2608
  %v2702 = vadd.f32 %v2398, %v2610
  %v2703 = vadd.f32 %v2399, %v2612
  %v2704 = vadd.f32 %v2400, %v2614
  %v2705 = vadd.f32 %v2401, %v2616
  %v2706 = vadd.f32 %v2402, %v2618
  %v2707 = vadd.f32 %v2403, %v2620
  %v2708 = vadd.f32 %v2404, %v2622
  %v2709 = vadd.f32 %v2405, %v2624
  %v2710 = vadd.f32 %v2406, %v2626
  %v2711 = vadd.f32 %v2407, %v2628
  %v2712 = vadd.f32 %v2408, %v2630
  %v2713 = vadd.f32 %v2409, %v2632
  %v2714 = vadd.f32 %v2410, %v2634
  %v2715 = vadd.f32 %v2411, %v2636
  %v2716 = vadd.f32 %v2412, %v2638
  %v2717 = vadd.f32 %v2413, %v2640
  %v2718 = vadd.f32 %v2414, %v2642
  %v2719 = vadd.f32 %v2415, %v2644
  %v2720 = vadd.f32 %v2416, %v2646
  %v2721 = vadd.f32 %v2417, %v2648
  %v2722 = vadd.f32 %v2418, %v2650
  %v2723 = vadd.f32 %v2419, %v2652
  %v2724 = vadd.f32 %v2420, %v2654
  %v2725 = vadd.f32 %v2421, %v2656
  %v2726 = vadd.f32 %v2422, %v2658
  %v2727 = vadd.f32 %v2423, %v2660
  %v2728 = vadd.f32 %v2424, %v2662
  %v2729 = vadd.f32 %v2425, %v2664
  %v2730 = vadd.f32 %v2426, %v2666
  %vm2763 = vcmask 1046528
  %v2764 = vrot.slane %v2699, 1
  %v2765 = vrot.slane %v2700, 1
  %v2766 = vsel %vm2763, %v2764, %v2765
  %v2767 = vrot.slane %v2701, 1
  %v2768 = vrot.slane %v2702, 1
  %v2769 = vsel %vm2763, %v2767, %v2768
  %v2770 = vrot.slane %v2703, 1
  %v2771 = vrot.slane %v2704, 1
  %v2772 = vsel %vm2763, %v2770, %v2771
  %v2773 = vrot.slane %v2705, 1
  %v2774 = vrot.slane %v2706, 1
  %v2775 = vsel %vm2763, %v2773, %v2774
  %v2776 = vrot.slane %v2707, 1
  %v2777 = vrot.slane %v2708, 1
  %v2778 = vsel %vm2763, %v2776, %v2777
  %v2779 = vrot.slane %v2709, 1
  %v2780 = vrot.slane %v2710, 1
  %v2781 = vsel %vm2763, %v2779, %v2780
  %v2782 = vrot.slane %v2711, 1
  %v2783 = vrot.slane %v2712, 1
  %v2784 = vsel %vm2763, %v2782, %v2783
  %v2785 = vrot.slane %v2713, 1
  %v2786 = vrot.slane %v2714, 1
  %v2787 = vsel %vm2763, %v2785, %v2786
  %v2788 = vrot.slane %v2715, 1
  %v2789 = vrot.slane %v2716, 1
  %v2790 = vsel %vm2763, %v2788, %v2789
  %v2791 = vrot.slane %v2717, 1
  %v2792 = vrot.slane %v2718, 1
  %v2793 = vsel %vm2763, %v2791, %v2792
  %v2794 = vrot.slane %v2719, 1
  %v2795 = vrot.slane %v2720, 1
  %v2796 = vsel %vm2763, %v2794, %v2795
  %v2797 = vrot.slane %v2721, 1
  %v2798 = vrot.slane %v2722, 1
  %v2799 = vsel %vm2763, %v2797, %v2798
  %v2800 = vrot.slane %v2723, 1
  %v2801 = vrot.slane %v2724, 1
  %v2802 = vsel %vm2763, %v2800, %v2801
  %v2803 = vrot.slane %v2725, 1
  %v2804 = vrot.slane %v2726, 1
  %v2805 = vsel %vm2763, %v2803, %v2804
  %v2806 = vrot.slane %v2727, 1
  %v2807 = vrot.slane %v2728, 1
  %v2808 = vsel %vm2763, %v2806, %v2807
  %v2809 = vrot.slane %v2729, 1
  %v2810 = vrot.slane %v2730, 1
  %v2811 = vsel %vm2763, %v2809, %v2810
  %v2828 = vadd.f32 %v1781, %v2766
  %v2829 = vadd.f32 %v1782, %v2769
  %v2830 = vadd.f32 %v1783, %v2772
  %v2831 = vadd.f32 %v1784, %v2775
  %v2832 = vadd.f32 %v1785, %v2778
  %v2833 = vadd.f32 %v1786, %v2781
  %v2834 = vadd.f32 %v1787, %v2784
  %v2835 = vadd.f32 %v1788, %v2787
  %v2836 = vadd.f32 %v1789, %v2790
  %v2837 = vadd.f32 %v1790, %v2793
  %v2838 = vadd.f32 %v1791, %v2796
  %v2839 = vadd.f32 %v1792, %v2799
  %v2840 = vadd.f32 %v1793, %v2802
  %v2841 = vadd.f32 %v1794, %v2805
  %v2842 = vadd.f32 %v1795, %v2808
  %v2843 = vadd.f32 %v1796, %v2811
  %2844 = vst.msk [vmem:[%s8] sm:$0xff] %vm557, %v2828
  %2845 = vst.msk [vmem:[%s8 + $0x8] sm:$0xff] %vm557, %v2829
  %2846 = vst.msk [vmem:[%s8 + $0x10] sm:$0xff] %vm557, %v2830
  %2847 = vst.msk [vmem:[%s8 + $0x18] sm:$0xff] %vm557, %v2831
  %2848 = vst.msk [vmem:[%s8 + $0x20] sm:$0xff] %vm557, %v2832
  %2849 = vst.msk [vmem:[%s8 + $0x28] sm:$0xff] %vm557, %v2833
  %2850 = vst.msk [vmem:[%s8 + $0x30] sm:$0xff] %vm557, %v2834
  %2851 = vst.msk [vmem:[%s8 + $0x38] sm:$0xff] %vm557, %v2835
  %2852 = vst.msk [vmem:[%s8 + $0x40] sm:$0xff] %vm557, %v2836
  %2853 = vst.msk [vmem:[%s8 + $0x48] sm:$0xff] %vm557, %v2837
  %2854 = vst.msk [vmem:[%s8 + $0x50] sm:$0xff] %vm557, %v2838
  %2855 = vst.msk [vmem:[%s8 + $0x58] sm:$0xff] %vm557, %v2839
  %2856 = vst.msk [vmem:[%s8 + $0x60] sm:$0xff] %vm557, %v2840
  %2857 = vst.msk [vmem:[%s8 + $0x68] sm:$0xff] %vm557, %v2841
  %2858 = vst.msk [vmem:[%s8 + $0x70] sm:$0xff] %vm557, %v2842
  %2859 = vst.msk [vmem:[%s8 + $0x78] sm:$0xff] %vm557, %v2843
  // Predicated region
  $region34: #{tpu_custom_call.1} parent=0 // pred_check
    _
  $region35: #{tpu_custom_call.1} parent=0 // pred_check_branch
    %2861 = sbr.rel (0) target = $region37
  $region36: #{tpu_custom_call.1} parent=0 // pred_region
    _
  $region37: #{tpu_custom_call.1} parent=0 // pred_fallthru
    _
  // Predicated region
  $region38: #{tpu_custom_call.1} parent=0 // pred_check
    _
  $region39: #{tpu_custom_call.1} parent=0 // pred_check_branch
    %2863 = sbr.rel (0) target = $region41
  $region40: #{tpu_custom_call.1} parent=0 // pred_region
    _
  $region41: #{tpu_custom_call.1} parent=0 // pred_fallthru
    _

</llo_original>
